<compile_context>
chip_gen: v7x
topology: tpu7x:2x2x1
jax: 0.10.0
libtpu: 0.0.40
codegen_flags: <defaults>
</compile_context>

<pallas_src>
import functools
import math

import jax
import jax.numpy as jnp
from jax import lax
from jax.experimental import pallas as pl
from jax.experimental.pallas import tpu as pltpu


# ---------------------------------------------------------------------------
# Pallas kernel
# ---------------------------------------------------------------------------
def _bilstm_attn_kernel(
    x_ref,        # [T*BP, E]   bf16  embedded input, time-major, batch padded to BP
    w_in_ref,     # [E, 8H]     bf16  fused input weights: [fwd i|f|g|o , bwd i|f|g|o]
    b_in_ref,     # [1, 8H]     f32   fused biases (b_ih + b_hh), same layout
    whh_f_ref,    # [H, 4H]     bf16  forward  recurrent weights
    whh_b_ref,    # [H, 4H]     bf16  backward recurrent weights
    w_out_f_ref,  # [H, C]      bf16  output projection, forward half
    w_out_b_ref,  # [H, C]      bf16  output projection, backward half
    b_out_ref,    # [1, C]      f32   output bias
    logits_ref,   # [B, C]      f32   output
    attn_ref,     # [B, T]      f32   output (softmax attention over time)
    pre_ref,      # scratch VMEM [T*BP, 8H] f32 : precomputed input-side gates
    *, T, B, BP, H,
):
    G = 4 * H                                                 # 128 lanes per direction

    # ---- 1) hoisted input projection: ONE MXU matmul for both directions ----
    pre_ref[...] = (jnp.dot(x_ref[...], w_in_ref[...],
                            preferred_element_type=jnp.float32) + b_in_ref[...])

    def cell(pre_t, h, c, whh_ref):
        # pre_t: [BP, 4H] f32 ; h, c: [BP, H] f32.
        gates = pre_t + jnp.dot(h.astype(jnp.bfloat16), whh_ref[...],
                                preferred_element_type=jnp.float32)    # [BP, 4H]
        sg = jax.nn.sigmoid(gates)                            # full-width EUP pass
        tg = jnp.tanh(gates)                                  # full-width EUP pass
        i = sg[:, 0 * H:1 * H]
        f = sg[:, 1 * H:2 * H]
        g = tg[:, 2 * H:3 * H]
        o = sg[:, 3 * H:4 * H]
        c_new = f * c + i * g
        h_new = o * jnp.tanh(c_new)
        return h_new, c_new

    zeros = jnp.zeros((BP, H), jnp.float32)
    h_f, c_f = zeros, zeros
    h_b, c_b = zeros, zeros
    hs_f = [None] * T                                         # fwd hidden at position t
    hs_b = [None] * T                                         # bwd hidden at position t

    # ---- 2) fused fwd/bwd recurrence, fully unrolled (T static & small) ----
    for s in range(T):
        tf = s                                                # forward reads position s
        tb = T - 1 - s                                        # backward reads T-1-s
        pre_f = pre_ref[tf * BP:(tf + 1) * BP, 0:G]           # aligned [BP, 4H] load
        pre_b = pre_ref[tb * BP:(tb + 1) * BP, G:2 * G]
        h_f, c_f = cell(pre_f, h_f, c_f, whh_f_ref)
        h_b, c_b = cell(pre_b, h_b, c_b, whh_b_ref)
        hs_f[tf] = h_f
        hs_b[tb] = h_b

    q_f = hs_f[T - 1]                                         # final fwd hidden
    q_b = hs_b[0]                                             # final bwd hidden

    # ---- 3) attention scores: scores[b,t] = <[h_f(t);h_b(t)], [q_f;q_b]> ----
    lane_t = lax.broadcasted_iota(jnp.int32, (1, T), 1)       # [1, T]
    scores = jnp.zeros((BP, T), jnp.float32)
    for t in range(T):
        col = jnp.sum(hs_f[t] * q_f + hs_b[t] * q_b,
                      axis=1, keepdims=True)                  # [BP, 1]
        scores = scores + jnp.where(lane_t == t, col, 0.0)

    m = jnp.max(scores, axis=1, keepdims=True)
    e = jnp.exp(scores - m)
    soft = e / jnp.sum(e, axis=1, keepdims=True)              # [BP, T] softmax over T

    # ---- 4) context = sum_t soft[:, t] * h(t), per direction ----
    ctx_f = jnp.zeros((BP, H), jnp.float32)
    ctx_b = jnp.zeros((BP, H), jnp.float32)
    for t in range(T):
        w_t = soft[:, t:t + 1]                                # [BP, 1]
        ctx_f = ctx_f + hs_f[t] * w_t
        ctx_b = ctx_b + hs_b[t] * w_t

    # ---- 5) output projection (bf16 operands, f32 accumulate; weights pre-split) ----
    logits = (jnp.dot(ctx_f.astype(jnp.bfloat16), w_out_f_ref[...],
                      preferred_element_type=jnp.float32)
              + jnp.dot(ctx_b.astype(jnp.bfloat16), w_out_b_ref[...],
                        preferred_element_type=jnp.float32)
              + b_out_ref[...])                               # [BP, C]

    logits_ref[...] = logits[0:B, :]
    attn_ref[...] = soft[0:B, :]


# ---------------------------------------------------------------------------
# Wrapper: parameter packing (constant-folded under jit) + pallas_call
# ---------------------------------------------------------------------------
def bilstm_attention_forward(x_ids, params):
    """x_ids: int32 [B, T] token ids.  Returns (logits [B, C], attention [B, T])."""
    B, T = x_ids.shape
    emb_table = params["embedding"]                           # [V, E]
    E = emb_table.shape[1]
    H = params["w_hh_f"].shape[1]                             # PyTorch weight_hh: [4H, H]
    C = params["w_out"].shape[0]                              # PyTorch Linear weight: [C, 2H]
    G = 4 * H                                                 # 128 for H=32
    BP = max(8, ((B + 7) // 8) * 8)                           # sublane-padded batch

    # Embedding lookup on the transposed (tiny) id matrix -> time-major activations.
    # TODO(synk): the nn.Embedding row gather stays in XLA; an in-kernel DMA gather is
    # possible but unnecessary at these sizes.
    x_tm = jnp.take(emb_table, x_ids.T, axis=0)               # [T, B, E]
    x_pad = jnp.pad(x_tm, ((0, 0), (0, BP - B), (0, 0)))      # [T, BP, E]
    x2d = x_pad.reshape(T * BP, E).astype(jnp.bfloat16)       # [T*BP, E]

    # Fused parameters, gate-packed (PyTorch gate order i|f|g|o occupies 4H = 128 lanes).
    w_in = jnp.concatenate([params["w_ih_f"].T, params["w_ih_b"].T],
                           axis=1).astype(jnp.bfloat16)       # [E, 8H]
    b_in = jnp.concatenate([params["b_ih_f"] + params["b_hh_f"],
                            params["b_ih_b"] + params["b_hh_b"]])[None, :]  # [1, 8H] f32

    whh_f = params["w_hh_f"].T.astype(jnp.bfloat16)           # [H, 4H]
    whh_b = params["w_hh_b"].T.astype(jnp.bfloat16)           # [H, 4H]

    w_out_t = params["w_out"].T                               # [2H, C]
    w_out_f = w_out_t[:H].astype(jnp.bfloat16)                # [H, C]
    w_out_b = w_out_t[H:].astype(jnp.bfloat16)                # [H, C]
    b_out = params["b_out"][None, :]                          # [1, C] f32

    vmem = pl.BlockSpec(memory_space=pltpu.MemorySpace.VMEM)
    kernel = functools.partial(_bilstm_attn_kernel, T=T, B=B, BP=BP, H=H)
    logits, attn = pl.pallas_call(
        kernel,
        out_shape=(jax.ShapeDtypeStruct((B, C), jnp.float32),
                   jax.ShapeDtypeStruct((B, T), jnp.float32)),
        in_specs=[vmem] * 8,
        out_specs=(vmem, vmem),
        scratch_shapes=[pltpu.VMEM((T * BP, 2 * G), jnp.float32)],
        compiler_params=pltpu.CompilerParams(vmem_limit_bytes=4 * 1024 * 1024),
    )(x2d, w_in, b_in, whh_f, whh_b, w_out_f, w_out_b, b_out)
    return logits, attn


# ---------------------------------------------------------------------------
# Pure-JAX (f32) reference of the PyTorch module, for a correctness check
# ---------------------------------------------------------------------------
def _reference_forward(x_ids, params):
    H = params["w_hh_f"].shape[1]
    emb = jnp.take(params["embedding"], x_ids, axis=0)        # [B, T, E]
    x_tm = jnp.transpose(emb, (1, 0, 2))                      # [T, B, E]
    B = x_tm.shape[1]

    def run(x_seq, w_ih, w_hh, b):
        def step(carry, x_t):
            h, c = carry
            g = x_t @ w_ih.T + h @ w_hh.T + b
            i = jax.nn.sigmoid(g[:, 0 * H:1 * H])
            f = jax.nn.sigmoid(g[:, 1 * H:2 * H])
            gg = jnp.tanh(g[:, 2 * H:3 * H])
            o = jax.nn.sigmoid(g[:, 3 * H:4 * H])
            c = f * c + i * gg
            h = o * jnp.tanh(c)
            return (h, c), h
        h0 = jnp.zeros((B, H), jnp.float32)
        (h_last, _), hs = lax.scan(step, (h0, h0), x_seq)
        return hs, h_last

    hs_f, hf = run(x_tm, params["w_ih_f"], params["w_hh_f"],
                   params["b_ih_f"] + params["b_hh_f"])
    hs_b_rev, hb = run(x_tm[::-1], params["w_ih_b"], params["w_hh_b"],
                       params["b_ih_b"] + params["b_hh_b"])
    hs_b = hs_b_rev[::-1]

    out = jnp.transpose(jnp.concatenate([hs_f, hs_b], axis=-1), (1, 0, 2))  # [B,T,2H]
    query = jnp.concatenate([hf, hb], axis=-1)                              # [B, 2H]
    scores = jnp.einsum("bth,bh->bt", out, query)
    soft = jax.nn.softmax(scores, axis=1)
    ctx = jnp.einsum("bth,bt->bh", out, soft)
    logits = ctx @ params["w_out"].T + params["b_out"]
    return logits, soft


def init_params(key, vocab_size, embedding_dim, n_hidden, num_classes):
    """Deterministic synthetic parameters in PyTorch-native shapes."""
    H, E, C = n_hidden, embedding_dim, num_classes
    s = 1.0 / math.sqrt(H)
    ks = jax.random.split(key, 12)

    def u(k, shape):
        return jax.random.uniform(k, shape, jnp.float32, minval=-s, maxval=s)

    return {
        "embedding": jax.random.normal(ks[0], (vocab_size, E), jnp.float32),
        "w_ih_f": u(ks[1], (4 * H, E)), "w_hh_f": u(ks[2], (4 * H, H)),
        "b_ih_f": u(ks[3], (4 * H,)),   "b_hh_f": u(ks[4], (4 * H,)),
        "w_ih_b": u(ks[5], (4 * H, E)), "w_hh_b": u(ks[6], (4 * H, H)),
        "b_ih_b": u(ks[7], (4 * H,)),   "b_hh_b": u(ks[8], (4 * H,)),
        "w_out": u(ks[9], (C, 2 * H)),  "b_out": u(ks[10], (C,)),
    }


if __name__ == "__main__":
    vocab_size, embedding_dim, n_hidden, num_classes = 50, 16, 32, 4
    batch, seq_len = 2, 8

    root = jax.random.PRNGKey(0)
    k_param, k_data = jax.random.split(root)
    params = init_params(k_param, vocab_size, embedding_dim, n_hidden, num_classes)
    x_ids = jax.random.randint(k_data, (batch, seq_len), 0, vocab_size, dtype=jnp.int32)

    fwd = jax.jit(functools.partial(bilstm_attention_forward, params=params))
    logits, attention = fwd(x_ids)
    jax.block_until_ready((logits, attention))

    assert logits.shape == (batch, num_classes)
    assert attention.shape == (batch, seq_len)
    assert bool(jnp.all(jnp.isfinite(logits))) and bool(jnp.all(jnp.isfinite(attention)))
    assert bool(jnp.allclose(jnp.sum(attention, axis=1), 1.0, atol=1e-4))

    # Check against the f32 pure-JAX reference (bf16 MXU operands -> loose tol).
    ref_logits, ref_attn = _reference_forward(x_ids, params)
    assert bool(jnp.allclose(logits, ref_logits, atol=5e-2, rtol=5e-2))
    assert bool(jnp.allclose(attention, ref_attn, atol=5e-2, rtol=5e-2))

    print("KERNEL_OK")
</pallas_src>

<mosaic_0001>
module attributes {stable_mosaic.version = 11 : i64} {
  func.func @_bilstm_attn_kernel(%arg0: memref<64x16xbf16, #tpu.memory_space<vmem>>, %arg1: memref<16x256xbf16, #tpu.memory_space<vmem>>, %arg2: memref<1x256xf32, #tpu.memory_space<vmem>>, %arg3: memref<32x128xbf16, #tpu.memory_space<vmem>>, %arg4: memref<32x128xbf16, #tpu.memory_space<vmem>>, %arg5: memref<32x4xbf16, #tpu.memory_space<vmem>>, %arg6: memref<32x4xbf16, #tpu.memory_space<vmem>>, %arg7: memref<1x4xf32, #tpu.memory_space<vmem>>, %arg8: memref<2x4xf32, #tpu.memory_space<vmem>>, %arg9: memref<2x8xf32, #tpu.memory_space<vmem>>, %arg10: memref<64x256xf32, #tpu.memory_space<vmem>>) attributes {dimension_semantics = [], scalar_prefetch = 0 : i64, scratch_operands = 1 : i64, tpu.core_type = #tpu.core_type<tc>} {
    %c0 = arith.constant 0 : index
    %c0_0 = arith.constant 0 : index
    %0 = vector.load %arg0[%c0, %c0_0] : memref<64x16xbf16, #tpu.memory_space<vmem>>, vector<64x16xbf16>
    %c0_1 = arith.constant 0 : index
    %c0_2 = arith.constant 0 : index
    %1 = vector.load %arg1[%c0_1, %c0_2] : memref<16x256xbf16, #tpu.memory_space<vmem>>, vector<16x256xbf16>
    %cst = arith.constant dense<0.000000e+00> : vector<64x256xf32>
    %2 = tpu.matmul %0, %1, %cst {dimension_numbers = #tpu.dot_dimension_numbers<[1], [0], [0], [1], [0, 0, 1, 1], [], []>} : vector<64x16xbf16>, vector<16x256xbf16>, vector<64x256xf32> -> vector<64x256xf32>
    %c0_3 = arith.constant 0 : index
    %c0_4 = arith.constant 0 : index
    %3 = vector.load %arg2[%c0_3, %c0_4] : memref<1x256xf32, #tpu.memory_space<vmem>>, vector<1x256xf32>
    %4 = vector.broadcast %3 : vector<1x256xf32> to vector<64x256xf32>
    %5 = arith.addf %2, %4 : vector<64x256xf32>
    %c0_5 = arith.constant 0 : index
    %c0_6 = arith.constant 0 : index
    %6 = vector.load %arg10[%c0_5, %c0_6] : memref<64x256xf32, #tpu.memory_space<vmem>>, vector<64x256xf32>
    tpu.vector_store %arg10[%c0_5, %c0_6], %5 {strides = array<i32>} : memref<64x256xf32, #tpu.memory_space<vmem>>, vector<64x256xf32>,
    %cst_7 = arith.constant 0.000000e+00 : f32
    %7 = vector.broadcast %cst_7 : f32 to vector<8x32xf32>
    %c0_8 = arith.constant 0 : index
    %c0_9 = arith.constant 0 : index
    %8 = vector.load %arg10[%c0_8, %c0_9] : memref<64x256xf32, #tpu.memory_space<vmem>>, vector<8x128xf32>
    %c56 = arith.constant 56 : index
    %c128 = arith.constant 128 : index
    %9 = vector.load %arg10[%c56, %c128] : memref<64x256xf32, #tpu.memory_space<vmem>>, vector<8x128xf32>
    %10 = arith.truncf %7 : vector<8x32xf32> to vector<8x32xbf16>
    %c0_10 = arith.constant 0 : index
    %c0_11 = arith.constant 0 : index
    %11 = vector.load %arg3[%c0_10, %c0_11] : memref<32x128xbf16, #tpu.memory_space<vmem>>, vector<32x128xbf16>
    %cst_12 = arith.constant dense<0.000000e+00> : vector<8x128xf32>
    %12 = tpu.matmul %10, %11, %cst_12 {dimension_numbers = #tpu.dot_dimension_numbers<[1], [0], [0], [1], [0, 0, 1, 1], [], []>} : vector<8x32xbf16>, vector<32x128xbf16>, vector<8x128xf32> -> vector<8x128xf32>
    %13 = arith.addf %8, %12 : vector<8x128xf32>
    %14 = arith.negf %13 : vector<8x128xf32>
    %15 = math.exp %14 : vector<8x128xf32>
    %cst_13 = arith.constant 1.000000e+00 : f32
    %16 = vector.broadcast %cst_13 : f32 to vector<8x128xf32>
    %17 = arith.addf %16, %15 : vector<8x128xf32>
    %18 = arith.divf %16, %17 : vector<8x128xf32>
    %19 = math.tanh %13 : vector<8x128xf32>
    %20 = vector.extract_strided_slice %18 {offsets = [0, 0], sizes = [8, 32], strides = [1, 1]} : vector<8x128xf32> to vector<8x32xf32>
    %21 = vector.extract_strided_slice %18 {offsets = [0, 32], sizes = [8, 32], strides = [1, 1]} : vector<8x128xf32> to vector<8x32xf32>
    %22 = vector.extract_strided_slice %19 {offsets = [0, 64], sizes = [8, 32], strides = [1, 1]} : vector<8x128xf32> to vector<8x32xf32>
    %23 = vector.extract_strided_slice %18 {offsets = [0, 96], sizes = [8, 32], strides = [1, 1]} : vector<8x128xf32> to vector<8x32xf32>
    %24 = arith.mulf %21, %7 : vector<8x32xf32>
    %25 = arith.mulf %20, %22 : vector<8x32xf32>
    %26 = arith.addf %24, %25 : vector<8x32xf32>
    %27 = math.tanh %26 : vector<8x32xf32>
    %28 = arith.mulf %23, %27 : vector<8x32xf32>
    %29 = arith.truncf %7 : vector<8x32xf32> to vector<8x32xbf16>
    %c0_14 = arith.constant 0 : index
    %c0_15 = arith.constant 0 : index
    %30 = vector.load %arg4[%c0_14, %c0_15] : memref<32x128xbf16, #tpu.memory_space<vmem>>, vector<32x128xbf16>
    %cst_16 = arith.constant dense<0.000000e+00> : vector<8x128xf32>
    %31 = tpu.matmul %29, %30, %cst_16 {dimension_numbers = #tpu.dot_dimension_numbers<[1], [0], [0], [1], [0, 0, 1, 1], [], []>} : vector<8x32xbf16>, vector<32x128xbf16>, vector<8x128xf32> -> vector<8x128xf32>
    %32 = arith.addf %9, %31 : vector<8x128xf32>
    %33 = arith.negf %32 : vector<8x128xf32>
    %34 = math.exp %33 : vector<8x128xf32>
    %cst_17 = arith.constant 1.000000e+00 : f32
    %35 = vector.broadcast %cst_17 : f32 to vector<8x128xf32>
    %36 = arith.addf %35, %34 : vector<8x128xf32>
    %37 = arith.divf %35, %36 : vector<8x128xf32>
    %38 = math.tanh %32 : vector<8x128xf32>
    %39 = vector.extract_strided_slice %37 {offsets = [0, 0], sizes = [8, 32], strides = [1, 1]} : vector<8x128xf32> to vector<8x32xf32>
    %40 = vector.extract_strided_slice %37 {offsets = [0, 32], sizes = [8, 32], strides = [1, 1]} : vector<8x128xf32> to vector<8x32xf32>
    %41 = vector.extract_strided_slice %38 {offsets = [0, 64], sizes = [8, 32], strides = [1, 1]} : vector<8x128xf32> to vector<8x32xf32>
    %42 = vector.extract_strided_slice %37 {offsets = [0, 96], sizes = [8, 32], strides = [1, 1]} : vector<8x128xf32> to vector<8x32xf32>
    %43 = arith.mulf %40, %7 : vector<8x32xf32>
    %44 = arith.mulf %39, %41 : vector<8x32xf32>
    %45 = arith.addf %43, %44 : vector<8x32xf32>
    %46 = math.tanh %45 : vector<8x32xf32>
    %47 = arith.mulf %42, %46 : vector<8x32xf32>
    %c8 = arith.constant 8 : index
    %c0_18 = arith.constant 0 : index
    %48 = vector.load %arg10[%c8, %c0_18] : memref<64x256xf32, #tpu.memory_space<vmem>>, vector<8x128xf32>
    %c48 = arith.constant 48 : index
    %c128_19 = arith.constant 128 : index
    %49 = vector.load %arg10[%c48, %c128_19] : memref<64x256xf32, #tpu.memory_space<vmem>>, vector<8x128xf32>
    %50 = arith.truncf %28 : vector<8x32xf32> to vector<8x32xbf16>
    %c0_20 = arith.constant 0 : index
    %c0_21 = arith.constant 0 : index
    %51 = vector.load %arg3[%c0_20, %c0_21] : memref<32x128xbf16, #tpu.memory_space<vmem>>, vector<32x128xbf16>
    %cst_22 = arith.constant dense<0.000000e+00> : vector<8x128xf32>
    %52 = tpu.matmul %50, %51, %cst_22 {dimension_numbers = #tpu.dot_dimension_numbers<[1], [0], [0], [1], [0, 0, 1, 1], [], []>} : vector<8x32xbf16>, vector<32x128xbf16>, vector<8x128xf32> -> vector<8x128xf32>
    %53 = arith.addf %48, %52 : vector<8x128xf32>
    %54 = arith.negf %53 : vector<8x128xf32>
    %55 = math.exp %54 : vector<8x128xf32>
    %cst_23 = arith.constant 1.000000e+00 : f32
    %56 = vector.broadcast %cst_23 : f32 to vector<8x128xf32>
    %57 = arith.addf %56, %55 : vector<8x128xf32>
    %58 = arith.divf %56, %57 : vector<8x128xf32>
    %59 = math.tanh %53 : vector<8x128xf32>
    %60 = vector.extract_strided_slice %58 {offsets = [0, 0], sizes = [8, 32], strides = [1, 1]} : vector<8x128xf32> to vector<8x32xf32>
    %61 = vector.extract_strided_slice %58 {offsets = [0, 32], sizes = [8, 32], strides = [1, 1]} : vector<8x128xf32> to vector<8x32xf32>
    %62 = vector.extract_strided_slice %59 {offsets = [0, 64], sizes = [8, 32], strides = [1, 1]} : vector<8x128xf32> to vector<8x32xf32>
    %63 = vector.extract_strided_slice %58 {offsets = [0, 96], sizes = [8, 32], strides = [1, 1]} : vector<8x128xf32> to vector<8x32xf32>
    %64 = arith.mulf %61, %26 : vector<8x32xf32>
    %65 = arith.mulf %60, %62 : vector<8x32xf32>
    %66 = arith.addf %64, %65 : vector<8x32xf32>
    %67 = math.tanh %66 : vector<8x32xf32>
    %68 = arith.mulf %63, %67 : vector<8x32xf32>
    %69 = arith.truncf %47 : vector<8x32xf32> to vector<8x32xbf16>
    %c0_24 = arith.constant 0 : index
    %c0_25 = arith.constant 0 : index
    %70 = vector.load %arg4[%c0_24, %c0_25] : memref<32x128xbf16, #tpu.memory_space<vmem>>, vector<32x128xbf16>
    %cst_26 = arith.constant dense<0.000000e+00> : vector<8x128xf32>
    %71 = tpu.matmul %69, %70, %cst_26 {dimension_numbers = #tpu.dot_dimension_numbers<[1], [0], [0], [1], [0, 0, 1, 1], [], []>} : vector<8x32xbf16>, vector<32x128xbf16>, vector<8x128xf32> -> vector<8x128xf32>
    %72 = arith.addf %49, %71 : vector<8x128xf32>
    %73 = arith.negf %72 : vector<8x128xf32>
    %74 = math.exp %73 : vector<8x128xf32>
    %cst_27 = arith.constant 1.000000e+00 : f32
    %75 = vector.broadcast %cst_27 : f32 to vector<8x128xf32>
    %76 = arith.addf %75, %74 : vector<8x128xf32>
    %77 = arith.divf %75, %76 : vector<8x128xf32>
    %78 = math.tanh %72 : vector<8x128xf32>
    %79 = vector.extract_strided_slice %77 {offsets = [0, 0], sizes = [8, 32], strides = [1, 1]} : vector<8x128xf32> to vector<8x32xf32>
    %80 = vector.extract_strided_slice %77 {offsets = [0, 32], sizes = [8, 32], strides = [1, 1]} : vector<8x128xf32> to vector<8x32xf32>
    %81 = vector.extract_strided_slice %78 {offsets = [0, 64], sizes = [8, 32], strides = [1, 1]} : vector<8x128xf32> to vector<8x32xf32>
    %82 = vector.extract_strided_slice %77 {offsets = [0, 96], sizes = [8, 32], strides = [1, 1]} : vector<8x128xf32> to vector<8x32xf32>
    %83 = arith.mulf %80, %45 : vector<8x32xf32>
    %84 = arith.mulf %79, %81 : vector<8x32xf32>
    %85 = arith.addf %83, %84 : vector<8x32xf32>
    %86 = math.tanh %85 : vector<8x32xf32>
    %87 = arith.mulf %82, %86 : vector<8x32xf32>
    %c16 = arith.constant 16 : index
    %c0_28 = arith.constant 0 : index
    %88 = vector.load %arg10[%c16, %c0_28] : memref<64x256xf32, #tpu.memory_space<vmem>>, vector<8x128xf32>
    %c40 = arith.constant 40 : index
    %c128_29 = arith.constant 128 : index
    %89 = vector.load %arg10[%c40, %c128_29] : memref<64x256xf32, #tpu.memory_space<vmem>>, vector<8x128xf32>
    %90 = arith.truncf %68 : vector<8x32xf32> to vector<8x32xbf16>
    %c0_30 = arith.constant 0 : index
    %c0_31 = arith.constant 0 : index
    %91 = vector.load %arg3[%c0_30, %c0_31] : memref<32x128xbf16, #tpu.memory_space<vmem>>, vector<32x128xbf16>
    %cst_32 = arith.constant dense<0.000000e+00> : vector<8x128xf32>
    %92 = tpu.matmul %90, %91, %cst_32 {dimension_numbers = #tpu.dot_dimension_numbers<[1], [0], [0], [1], [0, 0, 1, 1], [], []>} : vector<8x32xbf16>, vector<32x128xbf16>, vector<8x128xf32> -> vector<8x128xf32>
    %93 = arith.addf %88, %92 : vector<8x128xf32>
    %94 = arith.negf %93 : vector<8x128xf32>
    %95 = math.exp %94 : vector<8x128xf32>
    %cst_33 = arith.constant 1.000000e+00 : f32
    %96 = vector.broadcast %cst_33 : f32 to vector<8x128xf32>
    %97 = arith.addf %96, %95 : vector<8x128xf32>
    %98 = arith.divf %96, %97 : vector<8x128xf32>
    %99 = math.tanh %93 : vector<8x128xf32>
    %100 = vector.extract_strided_slice %98 {offsets = [0, 0], sizes = [8, 32], strides = [1, 1]} : vector<8x128xf32> to vector<8x32xf32>
    %101 = vector.extract_strided_slice %98 {offsets = [0, 32], sizes = [8, 32], strides = [1, 1]} : vector<8x128xf32> to vector<8x32xf32>
    %102 = vector.extract_strided_slice %99 {offsets = [0, 64], sizes = [8, 32], strides = [1, 1]} : vector<8x128xf32> to vector<8x32xf32>
    %103 = vector.extract_strided_slice %98 {offsets = [0, 96], sizes = [8, 32], strides = [1, 1]} : vector<8x128xf32> to vector<8x32xf32>
    %104 = arith.mulf %101, %66 : vector<8x32xf32>
    %105 = arith.mulf %100, %102 : vector<8x32xf32>
    %106 = arith.addf %104, %105 : vector<8x32xf32>
    %107 = math.tanh %106 : vector<8x32xf32>
    %108 = arith.mulf %103, %107 : vector<8x32xf32>
    %109 = arith.truncf %87 : vector<8x32xf32> to vector<8x32xbf16>
    %c0_34 = arith.constant 0 : index
    %c0_35 = arith.constant 0 : index
    %110 = vector.load %arg4[%c0_34, %c0_35] : memref<32x128xbf16, #tpu.memory_space<vmem>>, vector<32x128xbf16>
    %cst_36 = arith.constant dense<0.000000e+00> : vector<8x128xf32>
    %111 = tpu.matmul %109, %110, %cst_36 {dimension_numbers = #tpu.dot_dimension_numbers<[1], [0], [0], [1], [0, 0, 1, 1], [], []>} : vector<8x32xbf16>, vector<32x128xbf16>, vector<8x128xf32> -> vector<8x128xf32>
    %112 = arith.addf %89, %111 : vector<8x128xf32>
    %113 = arith.negf %112 : vector<8x128xf32>
    %114 = math.exp %113 : vector<8x128xf32>
    %cst_37 = arith.constant 1.000000e+00 : f32
    %115 = vector.broadcast %cst_37 : f32 to vector<8x128xf32>
    %116 = arith.addf %115, %114 : vector<8x128xf32>
    %117 = arith.divf %115, %116 : vector<8x128xf32>
    %118 = math.tanh %112 : vector<8x128xf32>
    %119 = vector.extract_strided_slice %117 {offsets = [0, 0], sizes = [8, 32], strides = [1, 1]} : vector<8x128xf32> to vector<8x32xf32>
    %120 = vector.extract_strided_slice %117 {offsets = [0, 32], sizes = [8, 32], strides = [1, 1]} : vector<8x128xf32> to vector<8x32xf32>
    %121 = vector.extract_strided_slice %118 {offsets = [0, 64], sizes = [8, 32], strides = [1, 1]} : vector<8x128xf32> to vector<8x32xf32>
    %122 = vector.extract_strided_slice %117 {offsets = [0, 96], sizes = [8, 32], strides = [1, 1]} : vector<8x128xf32> to vector<8x32xf32>
    %123 = arith.mulf %120, %85 : vector<8x32xf32>
    %124 = arith.mulf %119, %121 : vector<8x32xf32>
    %125 = arith.addf %123, %124 : vector<8x32xf32>
    %126 = math.tanh %125 : vector<8x32xf32>
    %127 = arith.mulf %122, %126 : vector<8x32xf32>
    %c24 = arith.constant 24 : index
    %c0_38 = arith.constant 0 : index
    %128 = vector.load %arg10[%c24, %c0_38] : memref<64x256xf32, #tpu.memory_space<vmem>>, vector<8x128xf32>
    %c32 = arith.constant 32 : index
    %c128_39 = arith.constant 128 : index
    %129 = vector.load %arg10[%c32, %c128_39] : memref<64x256xf32, #tpu.memory_space<vmem>>, vector<8x128xf32>
    %130 = arith.truncf %108 : vector<8x32xf32> to vector<8x32xbf16>
    %c0_40 = arith.constant 0 : index
    %c0_41 = arith.constant 0 : index
    %131 = vector.load %arg3[%c0_40, %c0_41] : memref<32x128xbf16, #tpu.memory_space<vmem>>, vector<32x128xbf16>
    %cst_42 = arith.constant dense<0.000000e+00> : vector<8x128xf32>
    %132 = tpu.matmul %130, %131, %cst_42 {dimension_numbers = #tpu.dot_dimension_numbers<[1], [0], [0], [1], [0, 0, 1, 1], [], []>} : vector<8x32xbf16>, vector<32x128xbf16>, vector<8x128xf32> -> vector<8x128xf32>
    %133 = arith.addf %128, %132 : vector<8x128xf32>
    %134 = arith.negf %133 : vector<8x128xf32>
    %135 = math.exp %134 : vector<8x128xf32>
    %cst_43 = arith.constant 1.000000e+00 : f32
    %136 = vector.broadcast %cst_43 : f32 to vector<8x128xf32>
    %137 = arith.addf %136, %135 : vector<8x128xf32>
    %138 = arith.divf %136, %137 : vector<8x128xf32>
    %139 = math.tanh %133 : vector<8x128xf32>
    %140 = vector.extract_strided_slice %138 {offsets = [0, 0], sizes = [8, 32], strides = [1, 1]} : vector<8x128xf32> to vector<8x32xf32>
    %141 = vector.extract_strided_slice %138 {offsets = [0, 32], sizes = [8, 32], strides = [1, 1]} : vector<8x128xf32> to vector<8x32xf32>
    %142 = vector.extract_strided_slice %139 {offsets = [0, 64], sizes = [8, 32], strides = [1, 1]} : vector<8x128xf32> to vector<8x32xf32>
    %143 = vector.extract_strided_slice %138 {offsets = [0, 96], sizes = [8, 32], strides = [1, 1]} : vector<8x128xf32> to vector<8x32xf32>
    %144 = arith.mulf %141, %106 : vector<8x32xf32>
    %145 = arith.mulf %140, %142 : vector<8x32xf32>
    %146 = arith.addf %144, %145 : vector<8x32xf32>
    %147 = math.tanh %146 : vector<8x32xf32>
    %148 = arith.mulf %143, %147 : vector<8x32xf32>
    %149 = arith.truncf %127 : vector<8x32xf32> to vector<8x32xbf16>
    %c0_44 = arith.constant 0 : index
    %c0_45 = arith.constant 0 : index
    %150 = vector.load %arg4[%c0_44, %c0_45] : memref<32x128xbf16, #tpu.memory_space<vmem>>, vector<32x128xbf16>
    %cst_46 = arith.constant dense<0.000000e+00> : vector<8x128xf32>
    %151 = tpu.matmul %149, %150, %cst_46 {dimension_numbers = #tpu.dot_dimension_numbers<[1], [0], [0], [1], [0, 0, 1, 1], [], []>} : vector<8x32xbf16>, vector<32x128xbf16>, vector<8x128xf32> -> vector<8x128xf32>
    %152 = arith.addf %129, %151 : vector<8x128xf32>
    %153 = arith.negf %152 : vector<8x128xf32>
    %154 = math.exp %153 : vector<8x128xf32>
    %cst_47 = arith.constant 1.000000e+00 : f32
    %155 = vector.broadcast %cst_47 : f32 to vector<8x128xf32>
    %156 = arith.addf %155, %154 : vector<8x128xf32>
    %157 = arith.divf %155, %156 : vector<8x128xf32>
    %158 = math.tanh %152 : vector<8x128xf32>
    %159 = vector.extract_strided_slice %157 {offsets = [0, 0], sizes = [8, 32], strides = [1, 1]} : vector<8x128xf32> to vector<8x32xf32>
    %160 = vector.extract_strided_slice %157 {offsets = [0, 32], sizes = [8, 32], strides = [1, 1]} : vector<8x128xf32> to vector<8x32xf32>
    %161 = vector.extract_strided_slice %158 {offsets = [0, 64], sizes = [8, 32], strides = [1, 1]} : vector<8x128xf32> to vector<8x32xf32>
    %162 = vector.extract_strided_slice %157 {offsets = [0, 96], sizes = [8, 32], strides = [1, 1]} : vector<8x128xf32> to vector<8x32xf32>
    %163 = arith.mulf %160, %125 : vector<8x32xf32>
    %164 = arith.mulf %159, %161 : vector<8x32xf32>
    %165 = arith.addf %163, %164 : vector<8x32xf32>
    %166 = math.tanh %165 : vector<8x32xf32>
    %167 = arith.mulf %162, %166 : vector<8x32xf32>
    %c32_48 = arith.constant 32 : index
    %c0_49 = arith.constant 0 : index
    %168 = vector.load %arg10[%c32_48, %c0_49] : memref<64x256xf32, #tpu.memory_space<vmem>>, vector<8x128xf32>
    %c24_50 = arith.constant 24 : index
    %c128_51 = arith.constant 128 : index
    %169 = vector.load %arg10[%c24_50, %c128_51] : memref<64x256xf32, #tpu.memory_space<vmem>>, vector<8x128xf32>
    %170 = arith.truncf %148 : vector<8x32xf32> to vector<8x32xbf16>
    %c0_52 = arith.constant 0 : index
    %c0_53 = arith.constant 0 : index
    %171 = vector.load %arg3[%c0_52, %c0_53] : memref<32x128xbf16, #tpu.memory_space<vmem>>, vector<32x128xbf16>
    %cst_54 = arith.constant dense<0.000000e+00> : vector<8x128xf32>
    %172 = tpu.matmul %170, %171, %cst_54 {dimension_numbers = #tpu.dot_dimension_numbers<[1], [0], [0], [1], [0, 0, 1, 1], [], []>} : vector<8x32xbf16>, vector<32x128xbf16>, vector<8x128xf32> -> vector<8x128xf32>
    %173 = arith.addf %168, %172 : vector<8x128xf32>
    %174 = arith.negf %173 : vector<8x128xf32>
    %175 = math.exp %174 : vector<8x128xf32>
    %cst_55 = arith.constant 1.000000e+00 : f32
    %176 = vector.broadcast %cst_55 : f32 to vector<8x128xf32>
    %177 = arith.addf %176, %175 : vector<8x128xf32>
    %178 = arith.divf %176, %177 : vector<8x128xf32>
    %179 = math.tanh %173 : vector<8x128xf32>
    %180 = vector.extract_strided_slice %178 {offsets = [0, 0], sizes = [8, 32], strides = [1, 1]} : vector<8x128xf32> to vector<8x32xf32>
    %181 = vector.extract_strided_slice %178 {offsets = [0, 32], sizes = [8, 32], strides = [1, 1]} : vector<8x128xf32> to vector<8x32xf32>
    %182 = vector.extract_strided_slice %179 {offsets = [0, 64], sizes = [8, 32], strides = [1, 1]} : vector<8x128xf32> to vector<8x32xf32>
    %183 = vector.extract_strided_slice %178 {offsets = [0, 96], sizes = [8, 32], strides = [1, 1]} : vector<8x128xf32> to vector<8x32xf32>
    %184 = arith.mulf %181, %146 : vector<8x32xf32>
    %185 = arith.mulf %180, %182 : vector<8x32xf32>
    %186 = arith.addf %184, %185 : vector<8x32xf32>
    %187 = math.tanh %186 : vector<8x32xf32>
    %188 = arith.mulf %183, %187 : vector<8x32xf32>
    %189 = arith.truncf %167 : vector<8x32xf32> to vector<8x32xbf16>
    %c0_56 = arith.constant 0 : index
    %c0_57 = arith.constant 0 : index
    %190 = vector.load %arg4[%c0_56, %c0_57] : memref<32x128xbf16, #tpu.memory_space<vmem>>, vector<32x128xbf16>
    %cst_58 = arith.constant dense<0.000000e+00> : vector<8x128xf32>
    %191 = tpu.matmul %189, %190, %cst_58 {dimension_numbers = #tpu.dot_dimension_numbers<[1], [0], [0], [1], [0, 0, 1, 1], [], []>} : vector<8x32xbf16>, vector<32x128xbf16>, vector<8x128xf32> -> vector<8x128xf32>
    %192 = arith.addf %169, %191 : vector<8x128xf32>
    %193 = arith.negf %192 : vector<8x128xf32>
    %194 = math.exp %193 : vector<8x128xf32>
    %cst_59 = arith.constant 1.000000e+00 : f32
    %195 = vector.broadcast %cst_59 : f32 to vector<8x128xf32>
    %196 = arith.addf %195, %194 : vector<8x128xf32>
    %197 = arith.divf %195, %196 : vector<8x128xf32>
    %198 = math.tanh %192 : vector<8x128xf32>
    %199 = vector.extract_strided_slice %197 {offsets = [0, 0], sizes = [8, 32], strides = [1, 1]} : vector<8x128xf32> to vector<8x32xf32>
    %200 = vector.extract_strided_slice %197 {offsets = [0, 32], sizes = [8, 32], strides = [1, 1]} : vector<8x128xf32> to vector<8x32xf32>
    %201 = vector.extract_strided_slice %198 {offsets = [0, 64], sizes = [8, 32], strides = [1, 1]} : vector<8x128xf32> to vector<8x32xf32>
    %202 = vector.extract_strided_slice %197 {offsets = [0, 96], sizes = [8, 32], strides = [1, 1]} : vector<8x128xf32> to vector<8x32xf32>
    %203 = arith.mulf %200, %165 : vector<8x32xf32>
    %204 = arith.mulf %199, %201 : vector<8x32xf32>
    %205 = arith.addf %203, %204 : vector<8x32xf32>
    %206 = math.tanh %205 : vector<8x32xf32>
    %207 = arith.mulf %202, %206 : vector<8x32xf32>
    %c40_60 = arith.constant 40 : index
    %c0_61 = arith.constant 0 : index
    %208 = vector.load %arg10[%c40_60, %c0_61] : memref<64x256xf32, #tpu.memory_space<vmem>>, vector<8x128xf32>
    %c16_62 = arith.constant 16 : index
    %c128_63 = arith.constant 128 : index
    %209 = vector.load %arg10[%c16_62, %c128_63] : memref<64x256xf32, #tpu.memory_space<vmem>>, vector<8x128xf32>
    %210 = arith.truncf %188 : vector<8x32xf32> to vector<8x32xbf16>
    %c0_64 = arith.constant 0 : index
    %c0_65 = arith.constant 0 : index
    %211 = vector.load %arg3[%c0_64, %c0_65] : memref<32x128xbf16, #tpu.memory_space<vmem>>, vector<32x128xbf16>
    %cst_66 = arith.constant dense<0.000000e+00> : vector<8x128xf32>
    %212 = tpu.matmul %210, %211, %cst_66 {dimension_numbers = #tpu.dot_dimension_numbers<[1], [0], [0], [1], [0, 0, 1, 1], [], []>} : vector<8x32xbf16>, vector<32x128xbf16>, vector<8x128xf32> -> vector<8x128xf32>
    %213 = arith.addf %208, %212 : vector<8x128xf32>
    %214 = arith.negf %213 : vector<8x128xf32>
    %215 = math.exp %214 : vector<8x128xf32>
    %cst_67 = arith.constant 1.000000e+00 : f32
    %216 = vector.broadcast %cst_67 : f32 to vector<8x128xf32>
    %217 = arith.addf %216, %215 : vector<8x128xf32>
    %218 = arith.divf %216, %217 : vector<8x128xf32>
    %219 = math.tanh %213 : vector<8x128xf32>
    %220 = vector.extract_strided_slice %218 {offsets = [0, 0], sizes = [8, 32], strides = [1, 1]} : vector<8x128xf32> to vector<8x32xf32>
    %221 = vector.extract_strided_slice %218 {offsets = [0, 32], sizes = [8, 32], strides = [1, 1]} : vector<8x128xf32> to vector<8x32xf32>
    %222 = vector.extract_strided_slice %219 {offsets = [0, 64], sizes = [8, 32], strides = [1, 1]} : vector<8x128xf32> to vector<8x32xf32>
    %223 = vector.extract_strided_slice %218 {offsets = [0, 96], sizes = [8, 32], strides = [1, 1]} : vector<8x128xf32> to vector<8x32xf32>
    %224 = arith.mulf %221, %186 : vector<8x32xf32>
    %225 = arith.mulf %220, %222 : vector<8x32xf32>
    %226 = arith.addf %224, %225 : vector<8x32xf32>
    %227 = math.tanh %226 : vector<8x32xf32>
    %228 = arith.mulf %223, %227 : vector<8x32xf32>
    %229 = arith.truncf %207 : vector<8x32xf32> to vector<8x32xbf16>
    %c0_68 = arith.constant 0 : index
    %c0_69 = arith.constant 0 : index
    %230 = vector.load %arg4[%c0_68, %c0_69] : memref<32x128xbf16, #tpu.memory_space<vmem>>, vector<32x128xbf16>
    %cst_70 = arith.constant dense<0.000000e+00> : vector<8x128xf32>
    %231 = tpu.matmul %229, %230, %cst_70 {dimension_numbers = #tpu.dot_dimension_numbers<[1], [0], [0], [1], [0, 0, 1, 1], [], []>} : vector<8x32xbf16>, vector<32x128xbf16>, vector<8x128xf32> -> vector<8x128xf32>
    %232 = arith.addf %209, %231 : vector<8x128xf32>
    %233 = arith.negf %232 : vector<8x128xf32>
    %234 = math.exp %233 : vector<8x128xf32>
    %cst_71 = arith.constant 1.000000e+00 : f32
    %235 = vector.broadcast %cst_71 : f32 to vector<8x128xf32>
    %236 = arith.addf %235, %234 : vector<8x128xf32>
    %237 = arith.divf %235, %236 : vector<8x128xf32>
    %238 = math.tanh %232 : vector<8x128xf32>
    %239 = vector.extract_strided_slice %237 {offsets = [0, 0], sizes = [8, 32], strides = [1, 1]} : vector<8x128xf32> to vector<8x32xf32>
    %240 = vector.extract_strided_slice %237 {offsets = [0, 32], sizes = [8, 32], strides = [1, 1]} : vector<8x128xf32> to vector<8x32xf32>
    %241 = vector.extract_strided_slice %238 {offsets = [0, 64], sizes = [8, 32], strides = [1, 1]} : vector<8x128xf32> to vector<8x32xf32>
    %242 = vector.extract_strided_slice %237 {offsets = [0, 96], sizes = [8, 32], strides = [1, 1]} : vector<8x128xf32> to vector<8x32xf32>
    %243 = arith.mulf %240, %205 : vector<8x32xf32>
    %244 = arith.mulf %239, %241 : vector<8x32xf32>
    %245 = arith.addf %243, %244 : vector<8x32xf32>
    %246 = math.tanh %245 : vector<8x32xf32>
    %247 = arith.mulf %242, %246 : vector<8x32xf32>
    %c48_72 = arith.constant 48 : index
    %c0_73 = arith.constant 0 : index
    %248 = vector.load %arg10[%c48_72, %c0_73] : memref<64x256xf32, #tpu.memory_space<vmem>>, vector<8x128xf32>
    %c8_74 = arith.constant 8 : index
    %c128_75 = arith.constant 128 : index
    %249 = vector.load %arg10[%c8_74, %c128_75] : memref<64x256xf32, #tpu.memory_space<vmem>>, vector<8x128xf32>
    %250 = arith.truncf %228 : vector<8x32xf32> to vector<8x32xbf16>
    %c0_76 = arith.constant 0 : index
    %c0_77 = arith.constant 0 : index
    %251 = vector.load %arg3[%c0_76, %c0_77] : memref<32x128xbf16, #tpu.memory_space<vmem>>, vector<32x128xbf16>
    %cst_78 = arith.constant dense<0.000000e+00> : vector<8x128xf32>
    %252 = tpu.matmul %250, %251, %cst_78 {dimension_numbers = #tpu.dot_dimension_numbers<[1], [0], [0], [1], [0, 0, 1, 1], [], []>} : vector<8x32xbf16>, vector<32x128xbf16>, vector<8x128xf32> -> vector<8x128xf32>
    %253 = arith.addf %248, %252 : vector<8x128xf32>
    %254 = arith.negf %253 : vector<8x128xf32>
    %255 = math.exp %254 : vector<8x128xf32>
    %cst_79 = arith.constant 1.000000e+00 : f32
    %256 = vector.broadcast %cst_79 : f32 to vector<8x128xf32>
    %257 = arith.addf %256, %255 : vector<8x128xf32>
    %258 = arith.divf %256, %257 : vector<8x128xf32>
    %259 = math.tanh %253 : vector<8x128xf32>
    %260 = vector.extract_strided_slice %258 {offsets = [0, 0], sizes = [8, 32], strides = [1, 1]} : vector<8x128xf32> to vector<8x32xf32>
    %261 = vector.extract_strided_slice %258 {offsets = [0, 32], sizes = [8, 32], strides = [1, 1]} : vector<8x128xf32> to vector<8x32xf32>
    %262 = vector.extract_strided_slice %259 {offsets = [0, 64], sizes = [8, 32], strides = [1, 1]} : vector<8x128xf32> to vector<8x32xf32>
    %263 = vector.extract_strided_slice %258 {offsets = [0, 96], sizes = [8, 32], strides = [1, 1]} : vector<8x128xf32> to vector<8x32xf32>
    %264 = arith.mulf %261, %226 : vector<8x32xf32>
    %265 = arith.mulf %260, %262 : vector<8x32xf32>
    %266 = arith.addf %264, %265 : vector<8x32xf32>
    %267 = math.tanh %266 : vector<8x32xf32>
    %268 = arith.mulf %263, %267 : vector<8x32xf32>
    %269 = arith.truncf %247 : vector<8x32xf32> to vector<8x32xbf16>
    %c0_80 = arith.constant 0 : index
    %c0_81 = arith.constant 0 : index
    %270 = vector.load %arg4[%c0_80, %c0_81] : memref<32x128xbf16, #tpu.memory_space<vmem>>, vector<32x128xbf16>
    %cst_82 = arith.constant dense<0.000000e+00> : vector<8x128xf32>
    %271 = tpu.matmul %269, %270, %cst_82 {dimension_numbers = #tpu.dot_dimension_numbers<[1], [0], [0], [1], [0, 0, 1, 1], [], []>} : vector<8x32xbf16>, vector<32x128xbf16>, vector<8x128xf32> -> vector<8x128xf32>
    %272 = arith.addf %249, %271 : vector<8x128xf32>
    %273 = arith.negf %272 : vector<8x128xf32>
    %274 = math.exp %273 : vector<8x128xf32>
    %cst_83 = arith.constant 1.000000e+00 : f32
    %275 = vector.broadcast %cst_83 : f32 to vector<8x128xf32>
    %276 = arith.addf %275, %274 : vector<8x128xf32>
    %277 = arith.divf %275, %276 : vector<8x128xf32>
    %278 = math.tanh %272 : vector<8x128xf32>
    %279 = vector.extract_strided_slice %277 {offsets = [0, 0], sizes = [8, 32], strides = [1, 1]} : vector<8x128xf32> to vector<8x32xf32>
    %280 = vector.extract_strided_slice %277 {offsets = [0, 32], sizes = [8, 32], strides = [1, 1]} : vector<8x128xf32> to vector<8x32xf32>
    %281 = vector.extract_strided_slice %278 {offsets = [0, 64], sizes = [8, 32], strides = [1, 1]} : vector<8x128xf32> to vector<8x32xf32>
    %282 = vector.extract_strided_slice %277 {offsets = [0, 96], sizes = [8, 32], strides = [1, 1]} : vector<8x128xf32> to vector<8x32xf32>
    %283 = arith.mulf %280, %245 : vector<8x32xf32>
    %284 = arith.mulf %279, %281 : vector<8x32xf32>
    %285 = arith.addf %283, %284 : vector<8x32xf32>
    %286 = math.tanh %285 : vector<8x32xf32>
    %287 = arith.mulf %282, %286 : vector<8x32xf32>
    %c56_84 = arith.constant 56 : index
    %c0_85 = arith.constant 0 : index
    %288 = vector.load %arg10[%c56_84, %c0_85] : memref<64x256xf32, #tpu.memory_space<vmem>>, vector<8x128xf32>
    %c0_86 = arith.constant 0 : index
    %c128_87 = arith.constant 128 : index
    %289 = vector.load %arg10[%c0_86, %c128_87] : memref<64x256xf32, #tpu.memory_space<vmem>>, vector<8x128xf32>
    %290 = arith.truncf %268 : vector<8x32xf32> to vector<8x32xbf16>
    %c0_88 = arith.constant 0 : index
    %c0_89 = arith.constant 0 : index
    %291 = vector.load %arg3[%c0_88, %c0_89] : memref<32x128xbf16, #tpu.memory_space<vmem>>, vector<32x128xbf16>
    %cst_90 = arith.constant dense<0.000000e+00> : vector<8x128xf32>
    %292 = tpu.matmul %290, %291, %cst_90 {dimension_numbers = #tpu.dot_dimension_numbers<[1], [0], [0], [1], [0, 0, 1, 1], [], []>} : vector<8x32xbf16>, vector<32x128xbf16>, vector<8x128xf32> -> vector<8x128xf32>
    %293 = arith.addf %288, %292 : vector<8x128xf32>
    %294 = arith.negf %293 : vector<8x128xf32>
    %295 = math.exp %294 : vector<8x128xf32>
    %cst_91 = arith.constant 1.000000e+00 : f32
    %296 = vector.broadcast %cst_91 : f32 to vector<8x128xf32>
    %297 = arith.addf %296, %295 : vector<8x128xf32>
    %298 = arith.divf %296, %297 : vector<8x128xf32>
    %299 = math.tanh %293 : vector<8x128xf32>
    %300 = vector.extract_strided_slice %298 {offsets = [0, 0], sizes = [8, 32], strides = [1, 1]} : vector<8x128xf32> to vector<8x32xf32>
    %301 = vector.extract_strided_slice %298 {offsets = [0, 32], sizes = [8, 32], strides = [1, 1]} : vector<8x128xf32> to vector<8x32xf32>
    %302 = vector.extract_strided_slice %299 {offsets = [0, 64], sizes = [8, 32], strides = [1, 1]} : vector<8x128xf32> to vector<8x32xf32>
    %303 = vector.extract_strided_slice %298 {offsets = [0, 96], sizes = [8, 32], strides = [1, 1]} : vector<8x128xf32> to vector<8x32xf32>
    %304 = arith.mulf %301, %266 : vector<8x32xf32>
    %305 = arith.mulf %300, %302 : vector<8x32xf32>
    %306 = arith.addf %304, %305 : vector<8x32xf32>
    %307 = math.tanh %306 : vector<8x32xf32>
    %308 = arith.mulf %303, %307 : vector<8x32xf32>
    %309 = arith.truncf %287 : vector<8x32xf32> to vector<8x32xbf16>
    %c0_92 = arith.constant 0 : index
    %c0_93 = arith.constant 0 : index
    %310 = vector.load %arg4[%c0_92, %c0_93] : memref<32x128xbf16, #tpu.memory_space<vmem>>, vector<32x128xbf16>
    %cst_94 = arith.constant dense<0.000000e+00> : vector<8x128xf32>
    %311 = tpu.matmul %309, %310, %cst_94 {dimension_numbers = #tpu.dot_dimension_numbers<[1], [0], [0], [1], [0, 0, 1, 1], [], []>} : vector<8x32xbf16>, vector<32x128xbf16>, vector<8x128xf32> -> vector<8x128xf32>
    %312 = arith.addf %289, %311 : vector<8x128xf32>
    %313 = arith.negf %312 : vector<8x128xf32>
    %314 = math.exp %313 : vector<8x128xf32>
    %cst_95 = arith.constant 1.000000e+00 : f32
    %315 = vector.broadcast %cst_95 : f32 to vector<8x128xf32>
    %316 = arith.addf %315, %314 : vector<8x128xf32>
    %317 = arith.divf %315, %316 : vector<8x128xf32>
    %318 = math.tanh %312 : vector<8x128xf32>
    %319 = vector.extract_strided_slice %317 {offsets = [0, 0], sizes = [8, 32], strides = [1, 1]} : vector<8x128xf32> to vector<8x32xf32>
    %320 = vector.extract_strided_slice %317 {offsets = [0, 32], sizes = [8, 32], strides = [1, 1]} : vector<8x128xf32> to vector<8x32xf32>
    %321 = vector.extract_strided_slice %318 {offsets = [0, 64], sizes = [8, 32], strides = [1, 1]} : vector<8x128xf32> to vector<8x32xf32>
    %322 = vector.extract_strided_slice %317 {offsets = [0, 96], sizes = [8, 32], strides = [1, 1]} : vector<8x128xf32> to vector<8x32xf32>
    %323 = arith.mulf %320, %285 : vector<8x32xf32>
    %324 = arith.mulf %319, %321 : vector<8x32xf32>
    %325 = arith.addf %323, %324 : vector<8x32xf32>
    %326 = math.tanh %325 : vector<8x32xf32>
    %327 = arith.mulf %322, %326 : vector<8x32xf32>
    %328 = tpu.iota {dimensions = array<i32: 1>} : vector<1x8xi32>
    %cst_96 = arith.constant 0.000000e+00 : f32
    %329 = vector.broadcast %cst_96 : f32 to vector<8x8xf32>
    %330 = arith.mulf %28, %308 : vector<8x32xf32>
    %331 = arith.mulf %327, %327 : vector<8x32xf32>
    %332 = arith.addf %330, %331 : vector<8x32xf32>
    %cst_97 = arith.constant dense<0.000000e+00> : vector<8xf32>
    %333 = vector.multi_reduction <add>, %332, %cst_97 [1] : vector<8x32xf32> to vector<8xf32>
    %334 = vector.shape_cast %333 : vector<8xf32> to vector<8x1xf32>
    %c0_i32 = arith.constant 0 : i32
    %335 = vector.broadcast %c0_i32 : i32 to vector<1x8xi32>
    %336 = arith.cmpi eq, %328, %335 : vector<1x8xi32>
    %cst_98 = arith.constant 0.000000e+00 : f32
    %337 = vector.shape_cast %336 : vector<1x8xi1> to vector<1x8xi1>
    %338 = vector.broadcast %337 : vector<1x8xi1> to vector<8x8xi1>
    %339 = vector.shape_cast %334 : vector<8x1xf32> to vector<8x1xf32>
    %340 = vector.broadcast %339 : vector<8x1xf32> to vector<8x8xf32>
    %341 = vector.broadcast %cst_98 : f32 to vector<8x8xf32>
    %342 = arith.select %338, %340, %341 : vector<8x8xi1>, vector<8x8xf32>
    %343 = arith.addf %329, %342 : vector<8x8xf32>
    %344 = arith.mulf %68, %308 : vector<8x32xf32>
    %345 = arith.mulf %287, %327 : vector<8x32xf32>
    %346 = arith.addf %344, %345 : vector<8x32xf32>
    %cst_99 = arith.constant dense<0.000000e+00> : vector<8xf32>
    %347 = vector.multi_reduction <add>, %346, %cst_99 [1] : vector<8x32xf32> to vector<8xf32>
    %348 = vector.shape_cast %347 : vector<8xf32> to vector<8x1xf32>
    %c1_i32 = arith.constant 1 : i32
    %349 = vector.broadcast %c1_i32 : i32 to vector<1x8xi32>
    %350 = arith.cmpi eq, %328, %349 : vector<1x8xi32>
    %cst_100 = arith.constant 0.000000e+00 : f32
    %351 = vector.shape_cast %350 : vector<1x8xi1> to vector<1x8xi1>
    %352 = vector.broadcast %351 : vector<1x8xi1> to vector<8x8xi1>
    %353 = vector.shape_cast %348 : vector<8x1xf32> to vector<8x1xf32>
    %354 = vector.broadcast %353 : vector<8x1xf32> to vector<8x8xf32>
    %355 = vector.broadcast %cst_100 : f32 to vector<8x8xf32>
    %356 = arith.select %352, %354, %355 : vector<8x8xi1>, vector<8x8xf32>
    %357 = arith.addf %343, %356 : vector<8x8xf32>
    %358 = arith.mulf %108, %308 : vector<8x32xf32>
    %359 = arith.mulf %247, %327 : vector<8x32xf32>
    %360 = arith.addf %358, %359 : vector<8x32xf32>
    %cst_101 = arith.constant dense<0.000000e+00> : vector<8xf32>
    %361 = vector.multi_reduction <add>, %360, %cst_101 [1] : vector<8x32xf32> to vector<8xf32>
    %362 = vector.shape_cast %361 : vector<8xf32> to vector<8x1xf32>
    %c2_i32 = arith.constant 2 : i32
    %363 = vector.broadcast %c2_i32 : i32 to vector<1x8xi32>
    %364 = arith.cmpi eq, %328, %363 : vector<1x8xi32>
    %cst_102 = arith.constant 0.000000e+00 : f32
    %365 = vector.shape_cast %364 : vector<1x8xi1> to vector<1x8xi1>
    %366 = vector.broadcast %365 : vector<1x8xi1> to vector<8x8xi1>
    %367 = vector.shape_cast %362 : vector<8x1xf32> to vector<8x1xf32>
    %368 = vector.broadcast %367 : vector<8x1xf32> to vector<8x8xf32>
    %369 = vector.broadcast %cst_102 : f32 to vector<8x8xf32>
    %370 = arith.select %366, %368, %369 : vector<8x8xi1>, vector<8x8xf32>
    %371 = arith.addf %357, %370 : vector<8x8xf32>
    %372 = arith.mulf %148, %308 : vector<8x32xf32>
    %373 = arith.mulf %207, %327 : vector<8x32xf32>
    %374 = arith.addf %372, %373 : vector<8x32xf32>
    %cst_103 = arith.constant dense<0.000000e+00> : vector<8xf32>
    %375 = vector.multi_reduction <add>, %374, %cst_103 [1] : vector<8x32xf32> to vector<8xf32>
    %376 = vector.shape_cast %375 : vector<8xf32> to vector<8x1xf32>
    %c3_i32 = arith.constant 3 : i32
    %377 = vector.broadcast %c3_i32 : i32 to vector<1x8xi32>
    %378 = arith.cmpi eq, %328, %377 : vector<1x8xi32>
    %cst_104 = arith.constant 0.000000e+00 : f32
    %379 = vector.shape_cast %378 : vector<1x8xi1> to vector<1x8xi1>
    %380 = vector.broadcast %379 : vector<1x8xi1> to vector<8x8xi1>
    %381 = vector.shape_cast %376 : vector<8x1xf32> to vector<8x1xf32>
    %382 = vector.broadcast %381 : vector<8x1xf32> to vector<8x8xf32>
    %383 = vector.broadcast %cst_104 : f32 to vector<8x8xf32>
    %384 = arith.select %380, %382, %383 : vector<8x8xi1>, vector<8x8xf32>
    %385 = arith.addf %371, %384 : vector<8x8xf32>
    %386 = arith.mulf %188, %308 : vector<8x32xf32>
    %387 = arith.mulf %167, %327 : vector<8x32xf32>
    %388 = arith.addf %386, %387 : vector<8x32xf32>
    %cst_105 = arith.constant dense<0.000000e+00> : vector<8xf32>
    %389 = vector.multi_reduction <add>, %388, %cst_105 [1] : vector<8x32xf32> to vector<8xf32>
    %390 = vector.shape_cast %389 : vector<8xf32> to vector<8x1xf32>
    %c4_i32 = arith.constant 4 : i32
    %391 = vector.broadcast %c4_i32 : i32 to vector<1x8xi32>
    %392 = arith.cmpi eq, %328, %391 : vector<1x8xi32>
    %cst_106 = arith.constant 0.000000e+00 : f32
    %393 = vector.shape_cast %392 : vector<1x8xi1> to vector<1x8xi1>
    %394 = vector.broadcast %393 : vector<1x8xi1> to vector<8x8xi1>
    %395 = vector.shape_cast %390 : vector<8x1xf32> to vector<8x1xf32>
    %396 = vector.broadcast %395 : vector<8x1xf32> to vector<8x8xf32>
    %397 = vector.broadcast %cst_106 : f32 to vector<8x8xf32>
    %398 = arith.select %394, %396, %397 : vector<8x8xi1>, vector<8x8xf32>
    %399 = arith.addf %385, %398 : vector<8x8xf32>
    %400 = arith.mulf %228, %308 : vector<8x32xf32>
    %401 = arith.mulf %127, %327 : vector<8x32xf32>
    %402 = arith.addf %400, %401 : vector<8x32xf32>
    %cst_107 = arith.constant dense<0.000000e+00> : vector<8xf32>
    %403 = vector.multi_reduction <add>, %402, %cst_107 [1] : vector<8x32xf32> to vector<8xf32>
    %404 = vector.shape_cast %403 : vector<8xf32> to vector<8x1xf32>
    %c5_i32 = arith.constant 5 : i32
    %405 = vector.broadcast %c5_i32 : i32 to vector<1x8xi32>
    %406 = arith.cmpi eq, %328, %405 : vector<1x8xi32>
    %cst_108 = arith.constant 0.000000e+00 : f32
    %407 = vector.shape_cast %406 : vector<1x8xi1> to vector<1x8xi1>
    %408 = vector.broadcast %407 : vector<1x8xi1> to vector<8x8xi1>
    %409 = vector.shape_cast %404 : vector<8x1xf32> to vector<8x1xf32>
    %410 = vector.broadcast %409 : vector<8x1xf32> to vector<8x8xf32>
    %411 = vector.broadcast %cst_108 : f32 to vector<8x8xf32>
    %412 = arith.select %408, %410, %411 : vector<8x8xi1>, vector<8x8xf32>
    %413 = arith.addf %399, %412 : vector<8x8xf32>
    %414 = arith.mulf %268, %308 : vector<8x32xf32>
    %415 = arith.mulf %87, %327 : vector<8x32xf32>
    %416 = arith.addf %414, %415 : vector<8x32xf32>
    %cst_109 = arith.constant dense<0.000000e+00> : vector<8xf32>
    %417 = vector.multi_reduction <add>, %416, %cst_109 [1] : vector<8x32xf32> to vector<8xf32>
    %418 = vector.shape_cast %417 : vector<8xf32> to vector<8x1xf32>
    %c6_i32 = arith.constant 6 : i32
    %419 = vector.broadcast %c6_i32 : i32 to vector<1x8xi32>
    %420 = arith.cmpi eq, %328, %419 : vector<1x8xi32>
    %cst_110 = arith.constant 0.000000e+00 : f32
    %421 = vector.shape_cast %420 : vector<1x8xi1> to vector<1x8xi1>
    %422 = vector.broadcast %421 : vector<1x8xi1> to vector<8x8xi1>
    %423 = vector.shape_cast %418 : vector<8x1xf32> to vector<8x1xf32>
    %424 = vector.broadcast %423 : vector<8x1xf32> to vector<8x8xf32>
    %425 = vector.broadcast %cst_110 : f32 to vector<8x8xf32>
    %426 = arith.select %422, %424, %425 : vector<8x8xi1>, vector<8x8xf32>
    %427 = arith.addf %413, %426 : vector<8x8xf32>
    %428 = arith.mulf %308, %308 : vector<8x32xf32>
    %429 = arith.mulf %47, %327 : vector<8x32xf32>
    %430 = arith.addf %428, %429 : vector<8x32xf32>
    %cst_111 = arith.constant dense<0.000000e+00> : vector<8xf32>
    %431 = vector.multi_reduction <add>, %430, %cst_111 [1] : vector<8x32xf32> to vector<8xf32>
    %432 = vector.shape_cast %431 : vector<8xf32> to vector<8x1xf32>
    %c7_i32 = arith.constant 7 : i32
    %433 = vector.broadcast %c7_i32 : i32 to vector<1x8xi32>
    %434 = arith.cmpi eq, %328, %433 : vector<1x8xi32>
    %cst_112 = arith.constant 0.000000e+00 : f32
    %435 = vector.shape_cast %434 : vector<1x8xi1> to vector<1x8xi1>
    %436 = vector.broadcast %435 : vector<1x8xi1> to vector<8x8xi1>
    %437 = vector.shape_cast %432 : vector<8x1xf32> to vector<8x1xf32>
    %438 = vector.broadcast %437 : vector<8x1xf32> to vector<8x8xf32>
    %439 = vector.broadcast %cst_112 : f32 to vector<8x8xf32>
    %440 = arith.select %436, %438, %439 : vector<8x8xi1>, vector<8x8xf32>
    %441 = arith.addf %427, %440 : vector<8x8xf32>
    %cst_113 = arith.constant dense<0xFF800000> : vector<8xf32>
    %442 = vector.multi_reduction <maximumf>, %441, %cst_113 [1] : vector<8x8xf32> to vector<8xf32>
    %443 = vector.shape_cast %442 : vector<8xf32> to vector<8x1xf32>
    %444 = vector.broadcast %443 : vector<8x1xf32> to vector<8x8xf32>
    %445 = arith.subf %441, %444 : vector<8x8xf32>
    %446 = math.exp %445 : vector<8x8xf32>
    %cst_114 = arith.constant dense<0.000000e+00> : vector<8xf32>
    %447 = vector.multi_reduction <add>, %446, %cst_114 [1] : vector<8x8xf32> to vector<8xf32>
    %448 = vector.shape_cast %447 : vector<8xf32> to vector<8x1xf32>
    %449 = vector.broadcast %448 : vector<8x1xf32> to vector<8x8xf32>
    %450 = arith.divf %446, %449 : vector<8x8xf32>
    %cst_115 = arith.constant 0.000000e+00 : f32
    %451 = vector.broadcast %cst_115 : f32 to vector<8x32xf32>
    %cst_116 = arith.constant 0.000000e+00 : f32
    %452 = vector.broadcast %cst_116 : f32 to vector<8x32xf32>
    %453 = vector.extract_strided_slice %450 {offsets = [0, 0], sizes = [8, 1], strides = [1, 1]} : vector<8x8xf32> to vector<8x1xf32>
    %454 = vector.broadcast %453 : vector<8x1xf32> to vector<8x32xf32>
    %455 = arith.mulf %28, %454 : vector<8x32xf32>
    %456 = arith.addf %451, %455 : vector<8x32xf32>
    %457 = vector.broadcast %453 : vector<8x1xf32> to vector<8x32xf32>
    %458 = arith.mulf %327, %457 : vector<8x32xf32>
    %459 = arith.addf %452, %458 : vector<8x32xf32>
    %460 = vector.extract_strided_slice %450 {offsets = [0, 1], sizes = [8, 1], strides = [1, 1]} : vector<8x8xf32> to vector<8x1xf32>
    %461 = vector.broadcast %460 : vector<8x1xf32> to vector<8x32xf32>
    %462 = arith.mulf %68, %461 : vector<8x32xf32>
    %463 = arith.addf %456, %462 : vector<8x32xf32>
    %464 = vector.broadcast %460 : vector<8x1xf32> to vector<8x32xf32>
    %465 = arith.mulf %287, %464 : vector<8x32xf32>
    %466 = arith.addf %459, %465 : vector<8x32xf32>
    %467 = vector.extract_strided_slice %450 {offsets = [0, 2], sizes = [8, 1], strides = [1, 1]} : vector<8x8xf32> to vector<8x1xf32>
    %468 = vector.broadcast %467 : vector<8x1xf32> to vector<8x32xf32>
    %469 = arith.mulf %108, %468 : vector<8x32xf32>
    %470 = arith.addf %463, %469 : vector<8x32xf32>
    %471 = vector.broadcast %467 : vector<8x1xf32> to vector<8x32xf32>
    %472 = arith.mulf %247, %471 : vector<8x32xf32>
    %473 = arith.addf %466, %472 : vector<8x32xf32>
    %474 = vector.extract_strided_slice %450 {offsets = [0, 3], sizes = [8, 1], strides = [1, 1]} : vector<8x8xf32> to vector<8x1xf32>
    %475 = vector.broadcast %474 : vector<8x1xf32> to vector<8x32xf32>
    %476 = arith.mulf %148, %475 : vector<8x32xf32>
    %477 = arith.addf %470, %476 : vector<8x32xf32>
    %478 = vector.broadcast %474 : vector<8x1xf32> to vector<8x32xf32>
    %479 = arith.mulf %207, %478 : vector<8x32xf32>
    %480 = arith.addf %473, %479 : vector<8x32xf32>
    %481 = vector.extract_strided_slice %450 {offsets = [0, 4], sizes = [8, 1], strides = [1, 1]} : vector<8x8xf32> to vector<8x1xf32>
    %482 = vector.broadcast %481 : vector<8x1xf32> to vector<8x32xf32>
    %483 = arith.mulf %188, %482 : vector<8x32xf32>
    %484 = arith.addf %477, %483 : vector<8x32xf32>
    %485 = vector.broadcast %481 : vector<8x1xf32> to vector<8x32xf32>
    %486 = arith.mulf %167, %485 : vector<8x32xf32>
    %487 = arith.addf %480, %486 : vector<8x32xf32>
    %488 = vector.extract_strided_slice %450 {offsets = [0, 5], sizes = [8, 1], strides = [1, 1]} : vector<8x8xf32> to vector<8x1xf32>
    %489 = vector.broadcast %488 : vector<8x1xf32> to vector<8x32xf32>
    %490 = arith.mulf %228, %489 : vector<8x32xf32>
    %491 = arith.addf %484, %490 : vector<8x32xf32>
    %492 = vector.broadcast %488 : vector<8x1xf32> to vector<8x32xf32>
    %493 = arith.mulf %127, %492 : vector<8x32xf32>
    %494 = arith.addf %487, %493 : vector<8x32xf32>
    %495 = vector.extract_strided_slice %450 {offsets = [0, 6], sizes = [8, 1], strides = [1, 1]} : vector<8x8xf32> to vector<8x1xf32>
    %496 = vector.broadcast %495 : vector<8x1xf32> to vector<8x32xf32>
    %497 = arith.mulf %268, %496 : vector<8x32xf32>
    %498 = arith.addf %491, %497 : vector<8x32xf32>
    %499 = vector.broadcast %495 : vector<8x1xf32> to vector<8x32xf32>
    %500 = arith.mulf %87, %499 : vector<8x32xf32>
    %501 = arith.addf %494, %500 : vector<8x32xf32>
    %502 = vector.extract_strided_slice %450 {offsets = [0, 7], sizes = [8, 1], strides = [1, 1]} : vector<8x8xf32> to vector<8x1xf32>
    %503 = vector.broadcast %502 : vector<8x1xf32> to vector<8x32xf32>
    %504 = arith.mulf %308, %503 : vector<8x32xf32>
    %505 = arith.addf %498, %504 : vector<8x32xf32>
    %506 = vector.broadcast %502 : vector<8x1xf32> to vector<8x32xf32>
    %507 = arith.mulf %47, %506 : vector<8x32xf32>
    %508 = arith.addf %501, %507 : vector<8x32xf32>
    %509 = arith.truncf %505 : vector<8x32xf32> to vector<8x32xbf16>
    %c0_117 = arith.constant 0 : index
    %c0_118 = arith.constant 0 : index
    %510 = vector.load %arg5[%c0_117, %c0_118] : memref<32x4xbf16, #tpu.memory_space<vmem>>, vector<32x4xbf16>
    %cst_119 = arith.constant dense<0.000000e+00> : vector<8x4xf32>
    %511 = tpu.matmul %509, %510, %cst_119 {dimension_numbers = #tpu.dot_dimension_numbers<[1], [0], [0], [1], [0, 0, 1, 1], [], []>} : vector<8x32xbf16>, vector<32x4xbf16>, vector<8x4xf32> -> vector<8x4xf32>
    %512 = arith.truncf %508 : vector<8x32xf32> to vector<8x32xbf16>
    %c0_120 = arith.constant 0 : index
    %c0_121 = arith.constant 0 : index
    %513 = vector.load %arg6[%c0_120, %c0_121] : memref<32x4xbf16, #tpu.memory_space<vmem>>, vector<32x4xbf16>
    %cst_122 = arith.constant dense<0.000000e+00> : vector<8x4xf32>
    %514 = tpu.matmul %512, %513, %cst_122 {dimension_numbers = #tpu.dot_dimension_numbers<[1], [0], [0], [1], [0, 0, 1, 1], [], []>} : vector<8x32xbf16>, vector<32x4xbf16>, vector<8x4xf32> -> vector<8x4xf32>
    %515 = arith.addf %511, %514 : vector<8x4xf32>
    %c0_123 = arith.constant 0 : index
    %c0_124 = arith.constant 0 : index
    %516 = vector.load %arg7[%c0_123, %c0_124] : memref<1x4xf32, #tpu.memory_space<vmem>>, vector<1x4xf32>
    %517 = vector.broadcast %516 : vector<1x4xf32> to vector<8x4xf32>
    %518 = arith.addf %515, %517 : vector<8x4xf32>
    %519 = vector.extract_strided_slice %518 {offsets = [0, 0], sizes = [2, 4], strides = [1, 1]} : vector<8x4xf32> to vector<2x4xf32>
    %c0_125 = arith.constant 0 : index
    %c0_126 = arith.constant 0 : index
    %520 = vector.load %arg8[%c0_125, %c0_126] : memref<2x4xf32, #tpu.memory_space<vmem>>, vector<2x4xf32>
    tpu.vector_store %arg8[%c0_125, %c0_126], %519 {strides = array<i32>} : memref<2x4xf32, #tpu.memory_space<vmem>>, vector<2x4xf32>,
    %521 = vector.extract_strided_slice %450 {offsets = [0, 0], sizes = [2, 8], strides = [1, 1]} : vector<8x8xf32> to vector<2x8xf32>
    %c0_127 = arith.constant 0 : index
    %c0_128 = arith.constant 0 : index
    %522 = vector.load %arg9[%c0_127, %c0_128] : memref<2x8xf32, #tpu.memory_space<vmem>>, vector<2x8xf32>
    tpu.vector_store %arg9[%c0_127, %c0_128], %521 {strides = array<i32>} : memref<2x8xf32, #tpu.memory_space<vmem>>, vector<2x8xf32>,
    return
  }
}

</mosaic_0001>

<llo_original>
// kernel: bilstm_attention_forward.1
$region0: #{bilstm_attention_forward.1}
  #allocation0 [shape = 'u32[]', space=smem, size = 0x4, offset = 0x4, fixed_abs, tag = 'smem constant byte address 0x4 - core index']
  #allocation1 [shape = 'u32[144,128]{1,0:T(1,128)}', space=vmem, size = 0x12000, scoped, tag = 'internal scratch']
  #allocation2 [shape = 'f32[64,256]{1,0:T(8,128)}', space=vmem, size = 0x10000, scoped, tag = 'scratch operand']
  %s0 = inlined_call_operand.vmem [shape: bf16[64,16], index: 0, kind: input, shape index: {}]
  %s1 = inlined_call_operand.vmem [shape: bf16[16,256], index: 1, kind: input, shape index: {}]
  %s2 = inlined_call_operand.vmem [shape: f32[1,256], index: 2, kind: input, shape index: {}]
  %s3 = inlined_call_operand.vmem [shape: bf16[32,128], index: 3, kind: input, shape index: {}]
  %s4 = inlined_call_operand.vmem [shape: bf16[32,128], index: 4, kind: input, shape index: {}]
  %s5 = inlined_call_operand.vmem [shape: bf16[32,4], index: 5, kind: input, shape index: {}]
  %s6 = inlined_call_operand.vmem [shape: bf16[32,4], index: 6, kind: input, shape index: {}]
  %s7 = inlined_call_operand.vmem [shape: f32[1,4], index: 7, kind: input, shape index: {}]
  %s8 = inlined_call_operand.hbm [shape: f32[2,4], index: 8, kind: output, shape index: {0}]
  %s9 = inlined_call_operand.hbm [shape: f32[2,8], index: 9, kind: output, shape index: {1}]
  %10 = xla_tuple %s8, %s9
  %s11 = sld [smem:[#allocation0]]
  $region50: #{bilstm_attention_forward.1} parent=0
    _
  %s13 = ssub.s32 1, %s11
  %s14 = scalar_select 0, %s13, %s11
  $region1: #{bilstm_attention_forward.1} parent=0
    #allocation3 [shape = 'u8[1024]{0}', space=vmem, size = 0x400, scoped, tag = 'output window, operand 0, single buffered']
    #allocation4 [shape = 's32[1]{0}', space=sflag, size = 0x4, scoped, tag = 'scoped memory for bilstm_attention_forward.1']
    #allocation5 [shape = 'u8[1024]{0}', space=vmem, size = 0x400, scoped, tag = 'output window, operand 1, single buffered']
    #allocation6 [shape = 's32[1]{0}', space=sflag, size = 0x4, scoped, tag = 'scoped memory for bilstm_attention_forward.1']
    %15 = vsyncpa [#allocation4], 0
    %16 = vsyncpa [#allocation6], 0
    // Predicated region
    $region2: #{bilstm_attention_forward.1} parent=1 // pred_check
      _
    $region3: #{bilstm_attention_forward.1} parent=1 // pred_check_branch
      %18 = sbr.rel (0) target = $region5
    $region4: #{bilstm_attention_forward.1} parent=1 // pred_region
      _
    $region5: #{bilstm_attention_forward.1} parent=1 // pred_fallthru
      _
    // Predicated region
    $region6: #{bilstm_attention_forward.1} parent=1 // pred_check
      _
    $region7: #{bilstm_attention_forward.1} parent=1 // pred_check_branch
      %20 = sbr.rel (0) target = $region9
    $region8: #{bilstm_attention_forward.1} parent=1 // pred_region
      _
    $region9: #{bilstm_attention_forward.1} parent=1 // pred_fallthru
      _
    // Predicated region
    $region10: #{bilstm_attention_forward.1} parent=1 // pred_check
      _
    $region11: #{bilstm_attention_forward.1} parent=1 // pred_check_branch
      %22 = sbr.rel (0) target = $region13
    $region12: #{bilstm_attention_forward.1} parent=1 // pred_region
      _
    $region13: #{bilstm_attention_forward.1} parent=1 // pred_fallthru
      _
    // Predicated region
    $region14: #{bilstm_attention_forward.1} parent=1 // pred_check
      _
    $region15: #{bilstm_attention_forward.1} parent=1 // pred_check_branch
      %24 = sbr.rel (0) target = $region17
    $region16: #{bilstm_attention_forward.1} parent=1 // pred_region
      _
    $region17: #{bilstm_attention_forward.1} parent=1 // pred_fallthru
      _
    // Predicated region
    $region18: #{bilstm_attention_forward.1} parent=1 // pred_check
      _
    $region19: #{bilstm_attention_forward.1} parent=1 // pred_check_branch
      %26 = sbr.rel (0) target = $region21
    $region20: #{bilstm_attention_forward.1} parent=1 // pred_region
      _
    $region21: #{bilstm_attention_forward.1} parent=1 // pred_fallthru
      _
    // Predicated region
    $region22: #{bilstm_attention_forward.1} parent=1 // pred_check
      _
    $region23: #{bilstm_attention_forward.1} parent=1 // pred_check_branch
      %28 = sbr.rel (0) target = $region25
    $region24: #{bilstm_attention_forward.1} parent=1 // pred_region
      _
    $region25: #{bilstm_attention_forward.1} parent=1 // pred_fallthru
      _
    // Predicated region
    $region26: #{bilstm_attention_forward.1} parent=1 // pred_check
      _
    $region27: #{bilstm_attention_forward.1} parent=1 // pred_check_branch
      %30 = sbr.rel (0) target = $region29
    $region28: #{bilstm_attention_forward.1} parent=1 // pred_region
      _
    $region29: #{bilstm_attention_forward.1} parent=1 // pred_fallthru
      _
    // Predicated region
    $region30: #{bilstm_attention_forward.1} parent=1 // pred_check
      _
    $region31: #{bilstm_attention_forward.1} parent=1 // pred_check_branch
      %32 = sbr.rel (0) target = $region33
    $region32: #{bilstm_attention_forward.1} parent=1 // pred_region
      _
    $region33: #{bilstm_attention_forward.1} parent=1 // pred_fallthru
      _
    %v34 = vld [vmem:[%s0] sm:$0xf]
    %v35 = vld [vmem:[%s0 + $0x4] sm:$0xf]
    %v36 = vld [vmem:[%s0 + $0x8] sm:$0xf]
    %v37 = vld [vmem:[%s0 + $0xc] sm:$0xf]
    %v38 = vld [vmem:[%s0 + $0x10] sm:$0xf]
    %v39 = vld [vmem:[%s0 + $0x14] sm:$0xf]
    %v40 = vld [vmem:[%s0 + $0x18] sm:$0xf]
    %v41 = vld [vmem:[%s0 + $0x1c] sm:$0xf]
    %v42 = vld [vmem:[%s1] sm:$0xff]
    %v43 = vld [vmem:[%s1 + $0x8] sm:$0xff]
    %v44 = vld [vmem:[%s2] sm:$0x3]
    %v46 = vlaneseq
    %v47 = vshrl.u32 %v46, 7
    %v48 = vsub.s32 0, %v47
    %v49 = vrot.slane %v44, %v48
    %v50 = vlaneseq
    %v51 = vshrl.u32 %v50, 7
    %v52 = vsub.s32 1, %v51
    %v53 = vrot.slane %v44, %v52
    %v64 = vunpack.c.l.b16 %v34
    %v65 = vunpack.c.l.b16 %v35
    %v66 = vunpack.c.l.b16 %v36
    %v67 = vunpack.c.l.b16 %v37
    %v68 = vunpack.c.l.b16 %v38
    %v69 = vunpack.c.l.b16 %v39
    %v70 = vunpack.c.l.b16 %v40
    %v71 = vunpack.c.l.b16 %v41
    %v72 = vpack.c.b16 %v65, %v64
    %v73 = vpack.c.b16 %v67, %v66
    %v74 = vpack.c.b16 %v69, %v68
    %v75 = vpack.c.b16 %v71, %v70
    %v78 = vunpack.c.l.b16 %v42
    %v79 = vunpack.c.h.b16 %v42
    %v80 = vunpack.c.l.b16 %v43
    %v81 = vunpack.c.h.b16 %v43
    %v82 = vpack.c.b16 %v80, %v78
    %v83 = vpack.c.b16 %v81, %v79
    %vm86 = vcmask 130048
    %v88 = vsel %vm86, %v72, 0
    %v91 = vsel %vm86, %v73, 0
    %v94 = vsel %vm86, %v74, 0
    %v97 = vsel %vm86, %v75, 0
    %99 = vmatprep.subr.bf16.mxu0 %v83
    %100 = vmatpush1.bf16.msra.mxu0 %v82
    %101 = vmatprep.subr.bf16.mxu0 0
    %102 = vmatpush1.bf16.msra.mxu0 0
    %103 = vmatprep.subr.bf16.mxu0 0
    %104 = vmatpush1.bf16.msra.mxu0 0
    %105 = vmatprep.subr.bf16.mxu0 0
    %106 = vmatpush1.bf16.msra.mxu0 0
    %107 = vmatprep.subr.bf16.mxu0 0
    %108 = vmatpush1.bf16.msra.mxu0 0
    %109 = vmatprep.subr.bf16.mxu0 0
    %110 = vmatpush1.bf16.msra.mxu0 0
    %111 = vmatprep.subr.bf16.mxu0 0
    %112 = vmatpush1.bf16.msra.mxu0 0
    %113 = vmatprep.subr.bf16.mxu0 0
    %114 = vmatpush1.bf16.msra.mxu0 0
    %115 = vmatprep.subr.bf16.mxu0 0
    %116 = vmatpush1.bf16.msra.mxu0 0
    %117 = vmatprep.subr.bf16.mxu0 0
    %118 = vmatpush1.bf16.msra.mxu0 0
    %119 = vmatprep.subr.bf16.mxu0 0
    %120 = vmatpush1.bf16.msra.mxu0 0
    %121 = vmatprep.subr.bf16.mxu0 0
    %122 = vmatpush1.bf16.msra.mxu0 0
    %123 = vmatprep.subr.bf16.mxu0 0
    %124 = vmatpush1.bf16.msra.mxu0 0
    %125 = vmatprep.subr.bf16.mxu0 0
    %126 = vmatpush1.bf16.msra.mxu0 0
    %127 = vmatprep.subr.bf16.mxu0 0
    %128 = vmatpush1.bf16.msra.mxu0 0
    %129 = vmatprep.subr.bf16.mxu0 0
    %130 = vmatpush1.bf16.msra.mxu0 0
    %131 = vmatprep.mubr.bf16.mxu0 0
    %132 = vmatmul.mubr.bf16.gmra.mrb[0].mxu0 %v88
    %v133 = vpop.f32.mrb[0].mxu0
    %v134 = vadd.f32 %v49, %v133
    %v135 = vpop.f32.mrb[0].mxu0
    %v136 = vadd.f32 %v53, %v135
    %v137 = vpop.f32.mrb[0].mxu0
    %v138 = vadd.f32 %v49, %v137
    %v139 = vpop.f32.mrb[0].mxu0
    %v140 = vadd.f32 %v53, %v139
    %141 = vmatprep.mubr.bf16.mxu0 0
    %142 = vmatmul.mubr.bf16.gmra.mrb[0].mxu0 %v91
    %v143 = vpop.f32.mrb[0].mxu0
    %v144 = vadd.f32 %v49, %v143
    %v145 = vpop.f32.mrb[0].mxu0
    %v146 = vadd.f32 %v53, %v145
    %v147 = vpop.f32.mrb[0].mxu0
    %v148 = vadd.f32 %v49, %v147
    %v149 = vpop.f32.mrb[0].mxu0
    %v150 = vadd.f32 %v53, %v149
    %151 = vmatprep.mubr.bf16.mxu0 0
    %152 = vmatmul.mubr.bf16.gmra.mrb[0].mxu0 %v94
    %v153 = vpop.f32.mrb[0].mxu0
    %v154 = vadd.f32 %v49, %v153
    %v155 = vpop.f32.mrb[0].mxu0
    %v156 = vadd.f32 %v53, %v155
    %v157 = vpop.f32.mrb[0].mxu0
    %v158 = vadd.f32 %v49, %v157
    %v159 = vpop.f32.mrb[0].mxu0
    %v160 = vadd.f32 %v53, %v159
    %161 = vmatprep.mubr.bf16.mxu0 0
    %162 = vmatmul.mubr.bf16.gmra.mrb[0].mxu0 %v97
    %v163 = vpop.f32.mrb[0].mxu0
    %v164 = vadd.f32 %v49, %v163
    %v165 = vpop.f32.mrb[0].mxu0
    %v166 = vadd.f32 %v53, %v165
    %v167 = vpop.f32.mrb[0].mxu0
    %v168 = vadd.f32 %v49, %v167
    %v169 = vpop.f32.mrb[0].mxu0
    %v170 = vadd.f32 %v53, %v169
    %171 = vdwg.mxu0
    %172 = vst [vmem:[#allocation2] sm:$0xff] %v134
    %173 = vst [vmem:[#allocation2 + $0x8] sm:$0xff] %v136
    %174 = vst [vmem:[#allocation2 + $0x10] sm:$0xff] %v138
    %175 = vst [vmem:[#allocation2 + $0x18] sm:$0xff] %v140
    %176 = vst [vmem:[#allocation2 + $0x20] sm:$0xff] %v144
    %177 = vst [vmem:[#allocation2 + $0x28] sm:$0xff] %v146
    %178 = vst [vmem:[#allocation2 + $0x30] sm:$0xff] %v148
    %179 = vst [vmem:[#allocation2 + $0x38] sm:$0xff] %v150
    %180 = vst [vmem:[#allocation2 + $0x40] sm:$0xff] %v154
    %181 = vst [vmem:[#allocation2 + $0x48] sm:$0xff] %v156
    %182 = vst [vmem:[#allocation2 + $0x50] sm:$0xff] %v158
    %183 = vst [vmem:[#allocation2 + $0x58] sm:$0xff] %v160
    %184 = vst [vmem:[#allocation2 + $0x60] sm:$0xff] %v164
    %185 = vst [vmem:[#allocation2 + $0x68] sm:$0xff] %v166
    %186 = vst [vmem:[#allocation2 + $0x70] sm:$0xff] %v168
    %187 = vst [vmem:[#allocation2 + $0x78] sm:$0xff] %v170
    %v188 = vld [vmem:[#allocation2] sm:$0xff]
    %v189 = vld [vmem:[#allocation2 + $0x78] sm:$0xff]
    %v190 = vld [vmem:[%s3] sm:$0xf]
    %v191 = vld [vmem:[%s3 + $0x4] sm:$0xf]
    %v192 = vld [vmem:[%s3 + $0x8] sm:$0xf]
    %v193 = vld [vmem:[%s3 + $0xc] sm:$0xf]
    %v198 = vunpack.c.l.b16 %v190
    %v199 = vunpack.c.l.b16 %v191
    %v200 = vunpack.c.l.b16 %v192
    %v201 = vunpack.c.l.b16 %v193
    %v202 = vpack.c.b16 %v199, %v198
    %v203 = vpack.c.b16 %v201, %v200
    %vm206 = vcmask 261120
    %v208 = vsel %vm206, 0, 0
    %210 = vmatprep.subr.bf16.mxu0 0
    %211 = vmatpush1.bf16.msra.mxu0 %v202
    %212 = vmatprep.subr.bf16.mxu0 0
    %213 = vmatpush1.bf16.msra.mxu0 %v203
    %214 = vmatprep.subr.bf16.mxu0 0
    %215 = vmatpush1.bf16.msra.mxu0 0
    %216 = vmatprep.subr.bf16.mxu0 0
    %217 = vmatpush1.bf16.msra.mxu0 0
    %218 = vmatprep.subr.bf16.mxu0 0
    %219 = vmatpush1.bf16.msra.mxu0 0
    %220 = vmatprep.subr.bf16.mxu0 0
    %221 = vmatpush1.bf16.msra.mxu0 0
    %222 = vmatprep.subr.bf16.mxu0 0
    %223 = vmatpush1.bf16.msra.mxu0 0
    %224 = vmatprep.subr.bf16.mxu0 0
    %225 = vmatpush1.bf16.msra.mxu0 0
    %226 = vmatprep.subr.bf16.mxu0 0
    %227 = vmatpush1.bf16.msra.mxu0 0
    %228 = vmatprep.subr.bf16.mxu0 0
    %229 = vmatpush1.bf16.msra.mxu0 0
    %230 = vmatprep.subr.bf16.mxu0 0
    %231 = vmatpush1.bf16.msra.mxu0 0
    %232 = vmatprep.subr.bf16.mxu0 0
    %233 = vmatpush1.bf16.msra.mxu0 0
    %234 = vmatprep.subr.bf16.mxu0 0
    %235 = vmatpush1.bf16.msra.mxu0 0
    %236 = vmatprep.subr.bf16.mxu0 0
    %237 = vmatpush1.bf16.msra.mxu0 0
    %238 = vmatprep.subr.bf16.mxu0 0
    %239 = vmatpush1.bf16.msra.mxu0 0
    %240 = vmatprep.subr.bf16.mxu0 0
    %241 = vmatpush1.bf16.msra.mxu0 0
    %242 = vmatprep.mubr.bf16.mxu0 0
    %243 = vmatmul.mubr.bf16.gmra.mrb[0].mxu0 %v208
    %v244 = vpop.f32.mrb[0].mxu0
    %v245 = vadd.f32 0.0, %v244
    %v246 = vpop.f32.mrb[0].mxu0
    %v247 = vpop.f32.mrb[0].mxu0
    %v248 = vpop.f32.mrb[0].mxu0
    %249 = vdwg.mxu0
    %v250 = vadd.f32 %v188, %v245
    %v251 = vxor.u32 %v250, 2147483648
    %v252 = vmul.f32 %v251, 1.442695
    %v253 = vpow.pop %v252
    %v254 = vadd.f32 %v253, 1.0
    %v255 = vrcp.pop %v254
    %v256 = vmul.f32 1.0, %v255
    %v257 = vtanh.pop %v250
    %v258 = vmul.f32 %v256, 0.0
    %260 = vrot.lane.b32.xlu0 %v257, 64
    %v261 = vpop.permute.xlu0 %260
    %v263 = vmul.f32 %v256, %v261
    %265 = vrot.lane.b32.xlu0 %v263, 32
    %v266 = vpop.permute.xlu0 %265
    %v268 = vadd.f32 %v258, %v266
    %v269 = vtanh.pop %v268
    %271 = vrot.lane.b32.xlu0 %v269, 64
    %v272 = vpop.permute.xlu0 %271
    %v274 = vmul.f32 %v256, %v272
    %v275 = vld [vmem:[%s4] sm:$0xf]
    %v276 = vld [vmem:[%s4 + $0x4] sm:$0xf]
    %v277 = vld [vmem:[%s4 + $0x8] sm:$0xf]
    %v278 = vld [vmem:[%s4 + $0xc] sm:$0xf]
    %v283 = vunpack.c.l.b16 %v275
    %v284 = vunpack.c.l.b16 %v276
    %v285 = vunpack.c.l.b16 %v277
    %v286 = vunpack.c.l.b16 %v278
    %v287 = vpack.c.b16 %v284, %v283
    %v288 = vpack.c.b16 %v286, %v285
    %291 = vmatprep.subr.bf16.mxu0 0
    %292 = vmatpush1.bf16.msra.mxu0 %v287
    %293 = vmatprep.subr.bf16.mxu0 0
    %294 = vmatpush1.bf16.msra.mxu0 %v288
    %295 = vmatprep.subr.bf16.mxu0 0
    %296 = vmatpush1.bf16.msra.mxu0 0
    %297 = vmatprep.subr.bf16.mxu0 0
    %298 = vmatpush1.bf16.msra.mxu0 0
    %299 = vmatprep.subr.bf16.mxu0 0
    %300 = vmatpush1.bf16.msra.mxu0 0
    %301 = vmatprep.subr.bf16.mxu0 0
    %302 = vmatpush1.bf16.msra.mxu0 0
    %303 = vmatprep.subr.bf16.mxu0 0
    %304 = vmatpush1.bf16.msra.mxu0 0
    %305 = vmatprep.subr.bf16.mxu0 0
    %306 = vmatpush1.bf16.msra.mxu0 0
    %307 = vmatprep.subr.bf16.mxu0 0
    %308 = vmatpush1.bf16.msra.mxu0 0
    %309 = vmatprep.subr.bf16.mxu0 0
    %310 = vmatpush1.bf16.msra.mxu0 0
    %311 = vmatprep.subr.bf16.mxu0 0
    %312 = vmatpush1.bf16.msra.mxu0 0
    %313 = vmatprep.subr.bf16.mxu0 0
    %314 = vmatpush1.bf16.msra.mxu0 0
    %315 = vmatprep.subr.bf16.mxu0 0
    %316 = vmatpush1.bf16.msra.mxu0 0
    %317 = vmatprep.subr.bf16.mxu0 0
    %318 = vmatpush1.bf16.msra.mxu0 0
    %319 = vmatprep.subr.bf16.mxu0 0
    %320 = vmatpush1.bf16.msra.mxu0 0
    %321 = vmatprep.subr.bf16.mxu0 0
    %322 = vmatpush1.bf16.msra.mxu0 0
    %323 = vmatprep.mubr.bf16.mxu0 0
    %324 = vmatmul.mubr.bf16.gmra.mrb[0].mxu0 %v208
    %v325 = vpop.f32.mrb[0].mxu0
    %v326 = vadd.f32 0.0, %v325
    %v327 = vpop.f32.mrb[0].mxu0
    %v328 = vpop.f32.mrb[0].mxu0
    %v329 = vpop.f32.mrb[0].mxu0
    %330 = vdwg.mxu0
    %v331 = vadd.f32 %v189, %v326
    %v332 = vxor.u32 %v331, 2147483648
    %v333 = vmul.f32 %v332, 1.442695
    %v334 = vpow.pop %v333
    %v335 = vadd.f32 %v334, 1.0
    %v336 = vrcp.pop %v335
    %v337 = vmul.f32 1.0, %v336
    %v338 = vtanh.pop %v331
    %v339 = vmul.f32 %v337, 0.0
    %341 = vrot.lane.b32.xlu0 %v338, 64
    %v342 = vpop.permute.xlu0 %341
    %v344 = vmul.f32 %v337, %v342
    %346 = vrot.lane.b32.xlu0 %v344, 32
    %v347 = vpop.permute.xlu0 %346
    %v349 = vadd.f32 %v339, %v347
    %v350 = vtanh.pop %v349
    %352 = vrot.lane.b32.xlu0 %v350, 64
    %v353 = vpop.permute.xlu0 %352
    %v355 = vmul.f32 %v337, %v353
    %v356 = vld [vmem:[#allocation2 + $0x10] sm:$0xff]
    %v357 = vld [vmem:[#allocation2 + $0x68] sm:$0xff]
    %v358 = vpack.c.bf16 %v274, %v274
    %360 = vrot.lane.b32.xlu0 %v358, 32
    %v361 = vpop.permute.xlu0 %360
    %v363 = vsel %vm206, %v361, 0
    %365 = vmatprep.subr.bf16.mxu0 0
    %366 = vmatpush1.bf16.msra.mxu0 %v202
    %367 = vmatprep.subr.bf16.mxu0 0
    %368 = vmatpush1.bf16.msra.mxu0 %v203
    %369 = vmatprep.subr.bf16.mxu0 0
    %370 = vmatpush1.bf16.msra.mxu0 0
    %371 = vmatprep.subr.bf16.mxu0 0
    %372 = vmatpush1.bf16.msra.mxu0 0
    %373 = vmatprep.subr.bf16.mxu0 0
    %374 = vmatpush1.bf16.msra.mxu0 0
    %375 = vmatprep.subr.bf16.mxu0 0
    %376 = vmatpush1.bf16.msra.mxu0 0
    %377 = vmatprep.subr.bf16.mxu0 0
    %378 = vmatpush1.bf16.msra.mxu0 0
    %379 = vmatprep.subr.bf16.mxu0 0
    %380 = vmatpush1.bf16.msra.mxu0 0
    %381 = vmatprep.subr.bf16.mxu0 0
    %382 = vmatpush1.bf16.msra.mxu0 0
    %383 = vmatprep.subr.bf16.mxu0 0
    %384 = vmatpush1.bf16.msra.mxu0 0
    %385 = vmatprep.subr.bf16.mxu0 0
    %386 = vmatpush1.bf16.msra.mxu0 0
    %387 = vmatprep.subr.bf16.mxu0 0
    %388 = vmatpush1.bf16.msra.mxu0 0
    %389 = vmatprep.subr.bf16.mxu0 0
    %390 = vmatpush1.bf16.msra.mxu0 0
    %391 = vmatprep.subr.bf16.mxu0 0
    %392 = vmatpush1.bf16.msra.mxu0 0
    %393 = vmatprep.subr.bf16.mxu0 0
    %394 = vmatpush1.bf16.msra.mxu0 0
    %395 = vmatprep.subr.bf16.mxu0 0
    %396 = vmatpush1.bf16.msra.mxu0 0
    %397 = vmatprep.mubr.bf16.mxu0 0
    %398 = vmatmul.mubr.bf16.gmra.mrb[0].mxu0 %v363
    %v399 = vpop.f32.mrb[0].mxu0
    %v400 = vadd.f32 0.0, %v399
    %v401 = vpop.f32.mrb[0].mxu0
    %v402 = vpop.f32.mrb[0].mxu0
    %v403 = vpop.f32.mrb[0].mxu0
    %404 = vdwg.mxu0
    %v405 = vadd.f32 %v356, %v400
    %v406 = vxor.u32 %v405, 2147483648
    %v407 = vmul.f32 %v406, 1.442695
    %v408 = vpow.pop %v407
    %v409 = vadd.f32 %v408, 1.0
    %v410 = vrcp.pop %v409
    %v411 = vmul.f32 1.0, %v410
    %v412 = vtanh.pop %v405
    %v413 = vmul.f32 %v411, %v268
    %415 = vrot.lane.b32.xlu0 %v412, 64
    %v416 = vpop.permute.xlu0 %415
    %v418 = vmul.f32 %v411, %v416
    %420 = vrot.lane.b32.xlu0 %v418, 32
    %v421 = vpop.permute.xlu0 %420
    %v423 = vadd.f32 %v413, %v421
    %v424 = vtanh.pop %v423
    %426 = vrot.lane.b32.xlu0 %v424, 64
    %v427 = vpop.permute.xlu0 %426
    %v429 = vmul.f32 %v411, %v427
    %v430 = vpack.c.bf16 %v355, %v355
    %432 = vrot.lane.b32.xlu0 %v430, 32
    %v433 = vpop.permute.xlu0 %432
    %v435 = vsel %vm206, %v433, 0
    %437 = vmatprep.subr.bf16.mxu0 0
    %438 = vmatpush1.bf16.msra.mxu0 %v287
    %439 = vmatprep.subr.bf16.mxu0 0
    %440 = vmatpush1.bf16.msra.mxu0 %v288
    %441 = vmatprep.subr.bf16.mxu0 0
    %442 = vmatpush1.bf16.msra.mxu0 0
    %443 = vmatprep.subr.bf16.mxu0 0
    %444 = vmatpush1.bf16.msra.mxu0 0
    %445 = vmatprep.subr.bf16.mxu0 0
    %446 = vmatpush1.bf16.msra.mxu0 0
    %447 = vmatprep.subr.bf16.mxu0 0
    %448 = vmatpush1.bf16.msra.mxu0 0
    %449 = vmatprep.subr.bf16.mxu0 0
    %450 = vmatpush1.bf16.msra.mxu0 0
    %451 = vmatprep.subr.bf16.mxu0 0
    %452 = vmatpush1.bf16.msra.mxu0 0
    %453 = vmatprep.subr.bf16.mxu0 0
    %454 = vmatpush1.bf16.msra.mxu0 0
    %455 = vmatprep.subr.bf16.mxu0 0
    %456 = vmatpush1.bf16.msra.mxu0 0
    %457 = vmatprep.subr.bf16.mxu0 0
    %458 = vmatpush1.bf16.msra.mxu0 0
    %459 = vmatprep.subr.bf16.mxu0 0
    %460 = vmatpush1.bf16.msra.mxu0 0
    %461 = vmatprep.subr.bf16.mxu0 0
    %462 = vmatpush1.bf16.msra.mxu0 0
    %463 = vmatprep.subr.bf16.mxu0 0
    %464 = vmatpush1.bf16.msra.mxu0 0
    %465 = vmatprep.subr.bf16.mxu0 0
    %466 = vmatpush1.bf16.msra.mxu0 0
    %467 = vmatprep.subr.bf16.mxu0 0
    %468 = vmatpush1.bf16.msra.mxu0 0
    %469 = vmatprep.mubr.bf16.mxu0 0
    %470 = vmatmul.mubr.bf16.gmra.mrb[0].mxu0 %v435
    %v471 = vpop.f32.mrb[0].mxu0
    %v472 = vadd.f32 0.0, %v471
    %v473 = vpop.f32.mrb[0].mxu0
    %v474 = vpop.f32.mrb[0].mxu0
    %v475 = vpop.f32.mrb[0].mxu0
    %476 = vdwg.mxu0
    %v477 = vadd.f32 %v357, %v472
    %v478 = vxor.u32 %v477, 2147483648
    %v479 = vmul.f32 %v478, 1.442695
    %v480 = vpow.pop %v479
    %v481 = vadd.f32 %v480, 1.0
    %v482 = vrcp.pop %v481
    %v483 = vmul.f32 1.0, %v482
    %v484 = vtanh.pop %v477
    %v485 = vmul.f32 %v483, %v349
    %487 = vrot.lane.b32.xlu0 %v484, 64
    %v488 = vpop.permute.xlu0 %487
    %v490 = vmul.f32 %v483, %v488
    %492 = vrot.lane.b32.xlu0 %v490, 32
    %v493 = vpop.permute.xlu0 %492
    %v495 = vadd.f32 %v485, %v493
    %v496 = vtanh.pop %v495
    %498 = vrot.lane.b32.xlu0 %v496, 64
    %v499 = vpop.permute.xlu0 %498
    %v501 = vmul.f32 %v483, %v499
    %v502 = vld [vmem:[#allocation2 + $0x20] sm:$0xff]
    %v503 = vld [vmem:[#allocation2 + $0x58] sm:$0xff]
    %v504 = vpack.c.bf16 %v429, %v429
    %506 = vrot.lane.b32.xlu0 %v504, 32
    %v507 = vpop.permute.xlu0 %506
    %v509 = vsel %vm206, %v507, 0
    %511 = vmatprep.subr.bf16.mxu0 0
    %512 = vmatpush1.bf16.msra.mxu0 %v202
    %513 = vmatprep.subr.bf16.mxu0 0
    %514 = vmatpush1.bf16.msra.mxu0 %v203
    %515 = vmatprep.subr.bf16.mxu0 0
    %516 = vmatpush1.bf16.msra.mxu0 0
    %517 = vmatprep.subr.bf16.mxu0 0
    %518 = vmatpush1.bf16.msra.mxu0 0
    %519 = vmatprep.subr.bf16.mxu0 0
    %520 = vmatpush1.bf16.msra.mxu0 0
    %521 = vmatprep.subr.bf16.mxu0 0
    %522 = vmatpush1.bf16.msra.mxu0 0
    %523 = vmatprep.subr.bf16.mxu0 0
    %524 = vmatpush1.bf16.msra.mxu0 0
    %525 = vmatprep.subr.bf16.mxu0 0
    %526 = vmatpush1.bf16.msra.mxu0 0
    %527 = vmatprep.subr.bf16.mxu0 0
    %528 = vmatpush1.bf16.msra.mxu0 0
    %529 = vmatprep.subr.bf16.mxu0 0
    %530 = vmatpush1.bf16.msra.mxu0 0
    %531 = vmatprep.subr.bf16.mxu0 0
    %532 = vmatpush1.bf16.msra.mxu0 0
    %533 = vmatprep.subr.bf16.mxu0 0
    %534 = vmatpush1.bf16.msra.mxu0 0
    %535 = vmatprep.subr.bf16.mxu0 0
    %536 = vmatpush1.bf16.msra.mxu0 0
    %537 = vmatprep.subr.bf16.mxu0 0
    %538 = vmatpush1.bf16.msra.mxu0 0
    %539 = vmatprep.subr.bf16.mxu0 0
    %540 = vmatpush1.bf16.msra.mxu0 0
    %541 = vmatprep.subr.bf16.mxu0 0
    %542 = vmatpush1.bf16.msra.mxu0 0
    %543 = vmatprep.mubr.bf16.mxu0 0
    %544 = vmatmul.mubr.bf16.gmra.mrb[0].mxu0 %v509
    %v545 = vpop.f32.mrb[0].mxu0
    %v546 = vadd.f32 0.0, %v545
    %v547 = vpop.f32.mrb[0].mxu0
    %v548 = vpop.f32.mrb[0].mxu0
    %v549 = vpop.f32.mrb[0].mxu0
    %550 = vdwg.mxu0
    %v551 = vadd.f32 %v502, %v546
    %v552 = vxor.u32 %v551, 2147483648
    %v553 = vmul.f32 %v552, 1.442695
    %v554 = vpow.pop %v553
    %v555 = vadd.f32 %v554, 1.0
    %v556 = vrcp.pop %v555
    %v557 = vmul.f32 1.0, %v556
    %v558 = vtanh.pop %v551
    %v559 = vmul.f32 %v557, %v423
    %561 = vrot.lane.b32.xlu0 %v558, 64
    %v562 = vpop.permute.xlu0 %561
    %v564 = vmul.f32 %v557, %v562
    %566 = vrot.lane.b32.xlu0 %v564, 32
    %v567 = vpop.permute.xlu0 %566
    %v569 = vadd.f32 %v559, %v567
    %v570 = vtanh.pop %v569
    %572 = vrot.lane.b32.xlu0 %v570, 64
    %v573 = vpop.permute.xlu0 %572
    %v575 = vmul.f32 %v557, %v573
    %v576 = vpack.c.bf16 %v501, %v501
    %578 = vrot.lane.b32.xlu0 %v576, 32
    %v579 = vpop.permute.xlu0 %578
    %v581 = vsel %vm206, %v579, 0
    %583 = vmatprep.subr.bf16.mxu0 0
    %584 = vmatpush1.bf16.msra.mxu0 %v287
    %585 = vmatprep.subr.bf16.mxu0 0
    %586 = vmatpush1.bf16.msra.mxu0 %v288
    %587 = vmatprep.subr.bf16.mxu0 0
    %588 = vmatpush1.bf16.msra.mxu0 0
    %589 = vmatprep.subr.bf16.mxu0 0
    %590 = vmatpush1.bf16.msra.mxu0 0
    %591 = vmatprep.subr.bf16.mxu0 0
    %592 = vmatpush1.bf16.msra.mxu0 0
    %593 = vmatprep.subr.bf16.mxu0 0
    %594 = vmatpush1.bf16.msra.mxu0 0
    %595 = vmatprep.subr.bf16.mxu0 0
    %596 = vmatpush1.bf16.msra.mxu0 0
    %597 = vmatprep.subr.bf16.mxu0 0
    %598 = vmatpush1.bf16.msra.mxu0 0
    %599 = vmatprep.subr.bf16.mxu0 0
    %600 = vmatpush1.bf16.msra.mxu0 0
    %601 = vmatprep.subr.bf16.mxu0 0
    %602 = vmatpush1.bf16.msra.mxu0 0
    %603 = vmatprep.subr.bf16.mxu0 0
    %604 = vmatpush1.bf16.msra.mxu0 0
    %605 = vmatprep.subr.bf16.mxu0 0
    %606 = vmatpush1.bf16.msra.mxu0 0
    %607 = vmatprep.subr.bf16.mxu0 0
    %608 = vmatpush1.bf16.msra.mxu0 0
    %609 = vmatprep.subr.bf16.mxu0 0
    %610 = vmatpush1.bf16.msra.mxu0 0
    %611 = vmatprep.subr.bf16.mxu0 0
    %612 = vmatpush1.bf16.msra.mxu0 0
    %613 = vmatprep.subr.bf16.mxu0 0
    %614 = vmatpush1.bf16.msra.mxu0 0
    %615 = vmatprep.mubr.bf16.mxu0 0
    %616 = vmatmul.mubr.bf16.gmra.mrb[0].mxu0 %v581
    %v617 = vpop.f32.mrb[0].mxu0
    %v618 = vadd.f32 0.0, %v617
    %v619 = vpop.f32.mrb[0].mxu0
    %v620 = vpop.f32.mrb[0].mxu0
    %v621 = vpop.f32.mrb[0].mxu0
    %622 = vdwg.mxu0
    %v623 = vadd.f32 %v503, %v618
    %v624 = vxor.u32 %v623, 2147483648
    %v625 = vmul.f32 %v624, 1.442695
    %v626 = vpow.pop %v625
    %v627 = vadd.f32 %v626, 1.0
    %v628 = vrcp.pop %v627
    %v629 = vmul.f32 1.0, %v628
    %v630 = vtanh.pop %v623
    %v631 = vmul.f32 %v629, %v495
    %633 = vrot.lane.b32.xlu0 %v630, 64
    %v634 = vpop.permute.xlu0 %633
    %v636 = vmul.f32 %v629, %v634
    %638 = vrot.lane.b32.xlu0 %v636, 32
    %v639 = vpop.permute.xlu0 %638
    %v641 = vadd.f32 %v631, %v639
    %v642 = vtanh.pop %v641
    %644 = vrot.lane.b32.xlu0 %v642, 64
    %v645 = vpop.permute.xlu0 %644
    %v647 = vmul.f32 %v629, %v645
    %v648 = vld [vmem:[#allocation2 + $0x30] sm:$0xff]
    %v649 = vld [vmem:[#allocation2 + $0x48] sm:$0xff]
    %v650 = vpack.c.bf16 %v575, %v575
    %652 = vrot.lane.b32.xlu0 %v650, 32
    %v653 = vpop.permute.xlu0 %652
    %v655 = vsel %vm206, %v653, 0
    %657 = vmatprep.subr.bf16.mxu0 0
    %658 = vmatpush1.bf16.msra.mxu0 %v202
    %659 = vmatprep.subr.bf16.mxu0 0
    %660 = vmatpush1.bf16.msra.mxu0 %v203
    %661 = vmatprep.subr.bf16.mxu0 0
    %662 = vmatpush1.bf16.msra.mxu0 0
    %663 = vmatprep.subr.bf16.mxu0 0
    %664 = vmatpush1.bf16.msra.mxu0 0
    %665 = vmatprep.subr.bf16.mxu0 0
    %666 = vmatpush1.bf16.msra.mxu0 0
    %667 = vmatprep.subr.bf16.mxu0 0
    %668 = vmatpush1.bf16.msra.mxu0 0
    %669 = vmatprep.subr.bf16.mxu0 0
    %670 = vmatpush1.bf16.msra.mxu0 0
    %671 = vmatprep.subr.bf16.mxu0 0
    %672 = vmatpush1.bf16.msra.mxu0 0
    %673 = vmatprep.subr.bf16.mxu0 0
    %674 = vmatpush1.bf16.msra.mxu0 0
    %675 = vmatprep.subr.bf16.mxu0 0
    %676 = vmatpush1.bf16.msra.mxu0 0
    %677 = vmatprep.subr.bf16.mxu0 0
    %678 = vmatpush1.bf16.msra.mxu0 0
    %679 = vmatprep.subr.bf16.mxu0 0
    %680 = vmatpush1.bf16.msra.mxu0 0
    %681 = vmatprep.subr.bf16.mxu0 0
    %682 = vmatpush1.bf16.msra.mxu0 0
    %683 = vmatprep.subr.bf16.mxu0 0
    %684 = vmatpush1.bf16.msra.mxu0 0
    %685 = vmatprep.subr.bf16.mxu0 0
    %686 = vmatpush1.bf16.msra.mxu0 0
    %687 = vmatprep.subr.bf16.mxu0 0
    %688 = vmatpush1.bf16.msra.mxu0 0
    %689 = vmatprep.mubr.bf16.mxu0 0
    %690 = vmatmul.mubr.bf16.gmra.mrb[0].mxu0 %v655
    %v691 = vpop.f32.mrb[0].mxu0
    %v692 = vadd.f32 0.0, %v691
    %v693 = vpop.f32.mrb[0].mxu0
    %v694 = vpop.f32.mrb[0].mxu0
    %v695 = vpop.f32.mrb[0].mxu0
    %696 = vdwg.mxu0
    %v697 = vadd.f32 %v648, %v692
    %v698 = vxor.u32 %v697, 2147483648
    %v699 = vmul.f32 %v698, 1.442695
    %v700 = vpow.pop %v699
    %v701 = vadd.f32 %v700, 1.0
    %v702 = vrcp.pop %v701
    %v703 = vmul.f32 1.0, %v702
    %v704 = vtanh.pop %v697
    %v705 = vmul.f32 %v703, %v569
    %707 = vrot.lane.b32.xlu0 %v704, 64
    %v708 = vpop.permute.xlu0 %707
    %v710 = vmul.f32 %v703, %v708
    %712 = vrot.lane.b32.xlu0 %v710, 32
    %v713 = vpop.permute.xlu0 %712
    %v715 = vadd.f32 %v705, %v713
    %v716 = vtanh.pop %v715
    %718 = vrot.lane.b32.xlu0 %v716, 64
    %v719 = vpop.permute.xlu0 %718
    %v721 = vmul.f32 %v703, %v719
    %v722 = vpack.c.bf16 %v647, %v647
    %724 = vrot.lane.b32.xlu0 %v722, 32
    %v725 = vpop.permute.xlu0 %724
    %v727 = vsel %vm206, %v725, 0
    %729 = vmatprep.subr.bf16.mxu0 0
    %730 = vmatpush1.bf16.msra.mxu0 %v287
    %731 = vmatprep.subr.bf16.mxu0 0
    %732 = vmatpush1.bf16.msra.mxu0 %v288
    %733 = vmatprep.subr.bf16.mxu0 0
    %734 = vmatpush1.bf16.msra.mxu0 0
    %735 = vmatprep.subr.bf16.mxu0 0
    %736 = vmatpush1.bf16.msra.mxu0 0
    %737 = vmatprep.subr.bf16.mxu0 0
    %738 = vmatpush1.bf16.msra.mxu0 0
    %739 = vmatprep.subr.bf16.mxu0 0
    %740 = vmatpush1.bf16.msra.mxu0 0
    %741 = vmatprep.subr.bf16.mxu0 0
    %742 = vmatpush1.bf16.msra.mxu0 0
    %743 = vmatprep.subr.bf16.mxu0 0
    %744 = vmatpush1.bf16.msra.mxu0 0
    %745 = vmatprep.subr.bf16.mxu0 0
    %746 = vmatpush1.bf16.msra.mxu0 0
    %747 = vmatprep.subr.bf16.mxu0 0
    %748 = vmatpush1.bf16.msra.mxu0 0
    %749 = vmatprep.subr.bf16.mxu0 0
    %750 = vmatpush1.bf16.msra.mxu0 0
    %751 = vmatprep.subr.bf16.mxu0 0
    %752 = vmatpush1.bf16.msra.mxu0 0
    %753 = vmatprep.subr.bf16.mxu0 0
    %754 = vmatpush1.bf16.msra.mxu0 0
    %755 = vmatprep.subr.bf16.mxu0 0
    %756 = vmatpush1.bf16.msra.mxu0 0
    %757 = vmatprep.subr.bf16.mxu0 0
    %758 = vmatpush1.bf16.msra.mxu0 0
    %759 = vmatprep.subr.bf16.mxu0 0
    %760 = vmatpush1.bf16.msra.mxu0 0
    %761 = vmatprep.mubr.bf16.mxu0 0
    %762 = vmatmul.mubr.bf16.gmra.mrb[0].mxu0 %v727
    %v763 = vpop.f32.mrb[0].mxu0
    %v764 = vadd.f32 0.0, %v763
    %v765 = vpop.f32.mrb[0].mxu0
    %v766 = vpop.f32.mrb[0].mxu0
    %v767 = vpop.f32.mrb[0].mxu0
    %768 = vdwg.mxu0
    %v769 = vadd.f32 %v649, %v764
    %v770 = vxor.u32 %v769, 2147483648
    %v771 = vmul.f32 %v770, 1.442695
    %v772 = vpow.pop %v771
    %v773 = vadd.f32 %v772, 1.0
    %v774 = vrcp.pop %v773
    %v775 = vmul.f32 1.0, %v774
    %v776 = vtanh.pop %v769
    %v777 = vmul.f32 %v775, %v641
    %779 = vrot.lane.b32.xlu0 %v776, 64
    %v780 = vpop.permute.xlu0 %779
    %v782 = vmul.f32 %v775, %v780
    %784 = vrot.lane.b32.xlu0 %v782, 32
    %v785 = vpop.permute.xlu0 %784
    %v787 = vadd.f32 %v777, %v785
    %v788 = vtanh.pop %v787
    %790 = vrot.lane.b32.xlu0 %v788, 64
    %v791 = vpop.permute.xlu0 %790
    %v793 = vmul.f32 %v775, %v791
    %v794 = vld [vmem:[#allocation2 + $0x40] sm:$0xff]
    %v795 = vld [vmem:[#allocation2 + $0x38] sm:$0xff]
    %v796 = vpack.c.bf16 %v721, %v721
    %798 = vrot.lane.b32.xlu0 %v796, 32
    %v799 = vpop.permute.xlu0 %798
    %v801 = vsel %vm206, %v799, 0
    %803 = vmatprep.subr.bf16.mxu0 0
    %804 = vmatpush1.bf16.msra.mxu0 %v202
    %805 = vmatprep.subr.bf16.mxu0 0
    %806 = vmatpush1.bf16.msra.mxu0 %v203
    %807 = vmatprep.subr.bf16.mxu0 0
    %808 = vmatpush1.bf16.msra.mxu0 0
    %809 = vmatprep.subr.bf16.mxu0 0
    %810 = vmatpush1.bf16.msra.mxu0 0
    %811 = vmatprep.subr.bf16.mxu0 0
    %812 = vmatpush1.bf16.msra.mxu0 0
    %813 = vmatprep.subr.bf16.mxu0 0
    %814 = vmatpush1.bf16.msra.mxu0 0
    %815 = vmatprep.subr.bf16.mxu0 0
    %816 = vmatpush1.bf16.msra.mxu0 0
    %817 = vmatprep.subr.bf16.mxu0 0
    %818 = vmatpush1.bf16.msra.mxu0 0
    %819 = vmatprep.subr.bf16.mxu0 0
    %820 = vmatpush1.bf16.msra.mxu0 0
    %821 = vmatprep.subr.bf16.mxu0 0
    %822 = vmatpush1.bf16.msra.mxu0 0
    %823 = vmatprep.subr.bf16.mxu0 0
    %824 = vmatpush1.bf16.msra.mxu0 0
    %825 = vmatprep.subr.bf16.mxu0 0
    %826 = vmatpush1.bf16.msra.mxu0 0
    %827 = vmatprep.subr.bf16.mxu0 0
    %828 = vmatpush1.bf16.msra.mxu0 0
    %829 = vmatprep.subr.bf16.mxu0 0
    %830 = vmatpush1.bf16.msra.mxu0 0
    %831 = vmatprep.subr.bf16.mxu0 0
    %832 = vmatpush1.bf16.msra.mxu0 0
    %833 = vmatprep.subr.bf16.mxu0 0
    %834 = vmatpush1.bf16.msra.mxu0 0
    %835 = vmatprep.mubr.bf16.mxu0 0
    %836 = vmatmul.mubr.bf16.gmra.mrb[0].mxu0 %v801
    %v837 = vpop.f32.mrb[0].mxu0
    %v838 = vadd.f32 0.0, %v837
    %v839 = vpop.f32.mrb[0].mxu0
    %v840 = vpop.f32.mrb[0].mxu0
    %v841 = vpop.f32.mrb[0].mxu0
    %842 = vdwg.mxu0
    %v843 = vadd.f32 %v794, %v838
    %v844 = vxor.u32 %v843, 2147483648
    %v845 = vmul.f32 %v844, 1.442695
    %v846 = vpow.pop %v845
    %v847 = vadd.f32 %v846, 1.0
    %v848 = vrcp.pop %v847
    %v849 = vmul.f32 1.0, %v848
    %v850 = vtanh.pop %v843
    %v851 = vmul.f32 %v849, %v715
    %853 = vrot.lane.b32.xlu0 %v850, 64
    %v854 = vpop.permute.xlu0 %853
    %v856 = vmul.f32 %v849, %v854
    %858 = vrot.lane.b32.xlu0 %v856, 32
    %v859 = vpop.permute.xlu0 %858
    %v861 = vadd.f32 %v851, %v859
    %v862 = vtanh.pop %v861
    %864 = vrot.lane.b32.xlu0 %v862, 64
    %v865 = vpop.permute.xlu0 %864
    %v867 = vmul.f32 %v849, %v865
    %v868 = vpack.c.bf16 %v793, %v793
    %870 = vrot.lane.b32.xlu0 %v868, 32
    %v871 = vpop.permute.xlu0 %870
    %v873 = vsel %vm206, %v871, 0
    %875 = vmatprep.subr.bf16.mxu0 0
    %876 = vmatpush1.bf16.msra.mxu0 %v287
    %877 = vmatprep.subr.bf16.mxu0 0
    %878 = vmatpush1.bf16.msra.mxu0 %v288
    %879 = vmatprep.subr.bf16.mxu0 0
    %880 = vmatpush1.bf16.msra.mxu0 0
    %881 = vmatprep.subr.bf16.mxu0 0
    %882 = vmatpush1.bf16.msra.mxu0 0
    %883 = vmatprep.subr.bf16.mxu0 0
    %884 = vmatpush1.bf16.msra.mxu0 0
    %885 = vmatprep.subr.bf16.mxu0 0
    %886 = vmatpush1.bf16.msra.mxu0 0
    %887 = vmatprep.subr.bf16.mxu0 0
    %888 = vmatpush1.bf16.msra.mxu0 0
    %889 = vmatprep.subr.bf16.mxu0 0
    %890 = vmatpush1.bf16.msra.mxu0 0
    %891 = vmatprep.subr.bf16.mxu0 0
    %892 = vmatpush1.bf16.msra.mxu0 0
    %893 = vmatprep.subr.bf16.mxu0 0
    %894 = vmatpush1.bf16.msra.mxu0 0
    %895 = vmatprep.subr.bf16.mxu0 0
    %896 = vmatpush1.bf16.msra.mxu0 0
    %897 = vmatprep.subr.bf16.mxu0 0
    %898 = vmatpush1.bf16.msra.mxu0 0
    %899 = vmatprep.subr.bf16.mxu0 0
    %900 = vmatpush1.bf16.msra.mxu0 0
    %901 = vmatprep.subr.bf16.mxu0 0
    %902 = vmatpush1.bf16.msra.mxu0 0
    %903 = vmatprep.subr.bf16.mxu0 0
    %904 = vmatpush1.bf16.msra.mxu0 0
    %905 = vmatprep.subr.bf16.mxu0 0
    %906 = vmatpush1.bf16.msra.mxu0 0
    %907 = vmatprep.mubr.bf16.mxu0 0
    %908 = vmatmul.mubr.bf16.gmra.mrb[0].mxu0 %v873
    %v909 = vpop.f32.mrb[0].mxu0
    %v910 = vadd.f32 0.0, %v909
    %v911 = vpop.f32.mrb[0].mxu0
    %v912 = vpop.f32.mrb[0].mxu0
    %v913 = vpop.f32.mrb[0].mxu0
    %914 = vdwg.mxu0
    %v915 = vadd.f32 %v795, %v910
    %v916 = vxor.u32 %v915, 2147483648
    %v917 = vmul.f32 %v916, 1.442695
    %v918 = vpow.pop %v917
    %v919 = vadd.f32 %v918, 1.0
    %v920 = vrcp.pop %v919
    %v921 = vmul.f32 1.0, %v920
    %v922 = vtanh.pop %v915
    %v923 = vmul.f32 %v921, %v787
    %925 = vrot.lane.b32.xlu0 %v922, 64
    %v926 = vpop.permute.xlu0 %925
    %v928 = vmul.f32 %v921, %v926
    %930 = vrot.lane.b32.xlu0 %v928, 32
    %v931 = vpop.permute.xlu0 %930
    %v933 = vadd.f32 %v923, %v931
    %v934 = vtanh.pop %v933
    %936 = vrot.lane.b32.xlu0 %v934, 64
    %v937 = vpop.permute.xlu0 %936
    %v939 = vmul.f32 %v921, %v937
    %v940 = vld [vmem:[#allocation2 + $0x50] sm:$0xff]
    %v941 = vld [vmem:[#allocation2 + $0x28] sm:$0xff]
    %v942 = vpack.c.bf16 %v867, %v867
    %944 = vrot.lane.b32.xlu0 %v942, 32
    %v945 = vpop.permute.xlu0 %944
    %v947 = vsel %vm206, %v945, 0
    %949 = vmatprep.subr.bf16.mxu0 0
    %950 = vmatpush1.bf16.msra.mxu0 %v202
    %951 = vmatprep.subr.bf16.mxu0 0
    %952 = vmatpush1.bf16.msra.mxu0 %v203
    %953 = vmatprep.subr.bf16.mxu0 0
    %954 = vmatpush1.bf16.msra.mxu0 0
    %955 = vmatprep.subr.bf16.mxu0 0
    %956 = vmatpush1.bf16.msra.mxu0 0
    %957 = vmatprep.subr.bf16.mxu0 0
    %958 = vmatpush1.bf16.msra.mxu0 0
    %959 = vmatprep.subr.bf16.mxu0 0
    %960 = vmatpush1.bf16.msra.mxu0 0
    %961 = vmatprep.subr.bf16.mxu0 0
    %962 = vmatpush1.bf16.msra.mxu0 0
    %963 = vmatprep.subr.bf16.mxu0 0
    %964 = vmatpush1.bf16.msra.mxu0 0
    %965 = vmatprep.subr.bf16.mxu0 0
    %966 = vmatpush1.bf16.msra.mxu0 0
    %967 = vmatprep.subr.bf16.mxu0 0
    %968 = vmatpush1.bf16.msra.mxu0 0
    %969 = vmatprep.subr.bf16.mxu0 0
    %970 = vmatpush1.bf16.msra.mxu0 0
    %971 = vmatprep.subr.bf16.mxu0 0
    %972 = vmatpush1.bf16.msra.mxu0 0
    %973 = vmatprep.subr.bf16.mxu0 0
    %974 = vmatpush1.bf16.msra.mxu0 0
    %975 = vmatprep.subr.bf16.mxu0 0
    %976 = vmatpush1.bf16.msra.mxu0 0
    %977 = vmatprep.subr.bf16.mxu0 0
    %978 = vmatpush1.bf16.msra.mxu0 0
    %979 = vmatprep.subr.bf16.mxu0 0
    %980 = vmatpush1.bf16.msra.mxu0 0
    %981 = vmatprep.mubr.bf16.mxu0 0
    %982 = vmatmul.mubr.bf16.gmra.mrb[0].mxu0 %v947
    %v983 = vpop.f32.mrb[0].mxu0
    %v984 = vadd.f32 0.0, %v983
    %v985 = vpop.f32.mrb[0].mxu0
    %v986 = vpop.f32.mrb[0].mxu0
    %v987 = vpop.f32.mrb[0].mxu0
    %988 = vdwg.mxu0
    %v989 = vadd.f32 %v940, %v984
    %v990 = vxor.u32 %v989, 2147483648
    %v991 = vmul.f32 %v990, 1.442695
    %v992 = vpow.pop %v991
    %v993 = vadd.f32 %v992, 1.0
    %v994 = vrcp.pop %v993
    %v995 = vmul.f32 1.0, %v994
    %v996 = vtanh.pop %v989
    %v997 = vmul.f32 %v995, %v861
    %999 = vrot.lane.b32.xlu0 %v996, 64
    %v1000 = vpop.permute.xlu0 %999
    %v1002 = vmul.f32 %v995, %v1000
    %1004 = vrot.lane.b32.xlu0 %v1002, 32
    %v1005 = vpop.permute.xlu0 %1004
    %v1007 = vadd.f32 %v997, %v1005
    %v1008 = vtanh.pop %v1007
    %1010 = vrot.lane.b32.xlu0 %v1008, 64
    %v1011 = vpop.permute.xlu0 %1010
    %v1013 = vmul.f32 %v995, %v1011
    %v1014 = vpack.c.bf16 %v939, %v939
    %1016 = vrot.lane.b32.xlu0 %v1014, 32
    %v1017 = vpop.permute.xlu0 %1016
    %v1019 = vsel %vm206, %v1017, 0
    %1021 = vmatprep.subr.bf16.mxu0 0
    %1022 = vmatpush1.bf16.msra.mxu0 %v287
    %1023 = vmatprep.subr.bf16.mxu0 0
    %1024 = vmatpush1.bf16.msra.mxu0 %v288
    %1025 = vmatprep.subr.bf16.mxu0 0
    %1026 = vmatpush1.bf16.msra.mxu0 0
    %1027 = vmatprep.subr.bf16.mxu0 0
    %1028 = vmatpush1.bf16.msra.mxu0 0
    %1029 = vmatprep.subr.bf16.mxu0 0
    %1030 = vmatpush1.bf16.msra.mxu0 0
    %1031 = vmatprep.subr.bf16.mxu0 0
    %1032 = vmatpush1.bf16.msra.mxu0 0
    %1033 = vmatprep.subr.bf16.mxu0 0
    %1034 = vmatpush1.bf16.msra.mxu0 0
    %1035 = vmatprep.subr.bf16.mxu0 0
    %1036 = vmatpush1.bf16.msra.mxu0 0
    %1037 = vmatprep.subr.bf16.mxu0 0
    %1038 = vmatpush1.bf16.msra.mxu0 0
    %1039 = vmatprep.subr.bf16.mxu0 0
    %1040 = vmatpush1.bf16.msra.mxu0 0
    %1041 = vmatprep.subr.bf16.mxu0 0
    %1042 = vmatpush1.bf16.msra.mxu0 0
    %1043 = vmatprep.subr.bf16.mxu0 0
    %1044 = vmatpush1.bf16.msra.mxu0 0
    %1045 = vmatprep.subr.bf16.mxu0 0
    %1046 = vmatpush1.bf16.msra.mxu0 0
    %1047 = vmatprep.subr.bf16.mxu0 0
    %1048 = vmatpush1.bf16.msra.mxu0 0
    %1049 = vmatprep.subr.bf16.mxu0 0
    %1050 = vmatpush1.bf16.msra.mxu0 0
    %1051 = vmatprep.subr.bf16.mxu0 0
    %1052 = vmatpush1.bf16.msra.mxu0 0
    %1053 = vmatprep.mubr.bf16.mxu0 0
    %1054 = vmatmul.mubr.bf16.gmra.mrb[0].mxu0 %v1019
    %v1055 = vpop.f32.mrb[0].mxu0
    %v1056 = vadd.f32 0.0, %v1055
    %v1057 = vpop.f32.mrb[0].mxu0
    %v1058 = vpop.f32.mrb[0].mxu0
    %v1059 = vpop.f32.mrb[0].mxu0
    %1060 = vdwg.mxu0
    %v1061 = vadd.f32 %v941, %v1056
    %v1062 = vxor.u32 %v1061, 2147483648
    %v1063 = vmul.f32 %v1062, 1.442695
    %v1064 = vpow.pop %v1063
    %v1065 = vadd.f32 %v1064, 1.0
    %v1066 = vrcp.pop %v1065
    %v1067 = vmul.f32 1.0, %v1066
    %v1068 = vtanh.pop %v1061
    %v1069 = vmul.f32 %v1067, %v933
    %1071 = vrot.lane.b32.xlu0 %v1068, 64
    %v1072 = vpop.permute.xlu0 %1071
    %v1074 = vmul.f32 %v1067, %v1072
    %1076 = vrot.lane.b32.xlu0 %v1074, 32
    %v1077 = vpop.permute.xlu0 %1076
    %v1079 = vadd.f32 %v1069, %v1077
    %v1080 = vtanh.pop %v1079
    %1082 = vrot.lane.b32.xlu0 %v1080, 64
    %v1083 = vpop.permute.xlu0 %1082
    %v1085 = vmul.f32 %v1067, %v1083
    %v1086 = vld [vmem:[#allocation2 + $0x60] sm:$0xff]
    %v1087 = vld [vmem:[#allocation2 + $0x18] sm:$0xff]
    %v1088 = vpack.c.bf16 %v1013, %v1013
    %1090 = vrot.lane.b32.xlu0 %v1088, 32
    %v1091 = vpop.permute.xlu0 %1090
    %v1093 = vsel %vm206, %v1091, 0
    %1095 = vmatprep.subr.bf16.mxu0 0
    %1096 = vmatpush1.bf16.msra.mxu0 %v202
    %1097 = vmatprep.subr.bf16.mxu0 0
    %1098 = vmatpush1.bf16.msra.mxu0 %v203
    %1099 = vmatprep.subr.bf16.mxu0 0
    %1100 = vmatpush1.bf16.msra.mxu0 0
    %1101 = vmatprep.subr.bf16.mxu0 0
    %1102 = vmatpush1.bf16.msra.mxu0 0
    %1103 = vmatprep.subr.bf16.mxu0 0
    %1104 = vmatpush1.bf16.msra.mxu0 0
    %1105 = vmatprep.subr.bf16.mxu0 0
    %1106 = vmatpush1.bf16.msra.mxu0 0
    %1107 = vmatprep.subr.bf16.mxu0 0
    %1108 = vmatpush1.bf16.msra.mxu0 0
    %1109 = vmatprep.subr.bf16.mxu0 0
    %1110 = vmatpush1.bf16.msra.mxu0 0
    %1111 = vmatprep.subr.bf16.mxu0 0
    %1112 = vmatpush1.bf16.msra.mxu0 0
    %1113 = vmatprep.subr.bf16.mxu0 0
    %1114 = vmatpush1.bf16.msra.mxu0 0
    %1115 = vmatprep.subr.bf16.mxu0 0
    %1116 = vmatpush1.bf16.msra.mxu0 0
    %1117 = vmatprep.subr.bf16.mxu0 0
    %1118 = vmatpush1.bf16.msra.mxu0 0
    %1119 = vmatprep.subr.bf16.mxu0 0
    %1120 = vmatpush1.bf16.msra.mxu0 0
    %1121 = vmatprep.subr.bf16.mxu0 0
    %1122 = vmatpush1.bf16.msra.mxu0 0
    %1123 = vmatprep.subr.bf16.mxu0 0
    %1124 = vmatpush1.bf16.msra.mxu0 0
    %1125 = vmatprep.subr.bf16.mxu0 0
    %1126 = vmatpush1.bf16.msra.mxu0 0
    %1127 = vmatprep.mubr.bf16.mxu0 0
    %1128 = vmatmul.mubr.bf16.gmra.mrb[0].mxu0 %v1093
    %v1129 = vpop.f32.mrb[0].mxu0
    %v1130 = vadd.f32 0.0, %v1129
    %v1131 = vpop.f32.mrb[0].mxu0
    %v1132 = vpop.f32.mrb[0].mxu0
    %v1133 = vpop.f32.mrb[0].mxu0
    %1134 = vdwg.mxu0
    %v1135 = vadd.f32 %v1086, %v1130
    %v1136 = vxor.u32 %v1135, 2147483648
    %v1137 = vmul.f32 %v1136, 1.442695
    %v1138 = vpow.pop %v1137
    %v1139 = vadd.f32 %v1138, 1.0
    %v1140 = vrcp.pop %v1139
    %v1141 = vmul.f32 1.0, %v1140
    %v1142 = vtanh.pop %v1135
    %v1143 = vmul.f32 %v1141, %v1007
    %1145 = vrot.lane.b32.xlu0 %v1142, 64
    %v1146 = vpop.permute.xlu0 %1145
    %v1148 = vmul.f32 %v1141, %v1146
    %1150 = vrot.lane.b32.xlu0 %v1148, 32
    %v1151 = vpop.permute.xlu0 %1150
    %v1153 = vadd.f32 %v1143, %v1151
    %v1154 = vtanh.pop %v1153
    %1156 = vrot.lane.b32.xlu0 %v1154, 64
    %v1157 = vpop.permute.xlu0 %1156
    %v1159 = vmul.f32 %v1141, %v1157
    %v1160 = vpack.c.bf16 %v1085, %v1085
    %1162 = vrot.lane.b32.xlu0 %v1160, 32
    %v1163 = vpop.permute.xlu0 %1162
    %v1165 = vsel %vm206, %v1163, 0
    %1167 = vmatprep.subr.bf16.mxu0 0
    %1168 = vmatpush1.bf16.msra.mxu0 %v287
    %1169 = vmatprep.subr.bf16.mxu0 0
    %1170 = vmatpush1.bf16.msra.mxu0 %v288
    %1171 = vmatprep.subr.bf16.mxu0 0
    %1172 = vmatpush1.bf16.msra.mxu0 0
    %1173 = vmatprep.subr.bf16.mxu0 0
    %1174 = vmatpush1.bf16.msra.mxu0 0
    %1175 = vmatprep.subr.bf16.mxu0 0
    %1176 = vmatpush1.bf16.msra.mxu0 0
    %1177 = vmatprep.subr.bf16.mxu0 0
    %1178 = vmatpush1.bf16.msra.mxu0 0
    %1179 = vmatprep.subr.bf16.mxu0 0
    %1180 = vmatpush1.bf16.msra.mxu0 0
    %1181 = vmatprep.subr.bf16.mxu0 0
    %1182 = vmatpush1.bf16.msra.mxu0 0
    %1183 = vmatprep.subr.bf16.mxu0 0
    %1184 = vmatpush1.bf16.msra.mxu0 0
    %1185 = vmatprep.subr.bf16.mxu0 0
    %1186 = vmatpush1.bf16.msra.mxu0 0
    %1187 = vmatprep.subr.bf16.mxu0 0
    %1188 = vmatpush1.bf16.msra.mxu0 0
    %1189 = vmatprep.subr.bf16.mxu0 0
    %1190 = vmatpush1.bf16.msra.mxu0 0
    %1191 = vmatprep.subr.bf16.mxu0 0
    %1192 = vmatpush1.bf16.msra.mxu0 0
    %1193 = vmatprep.subr.bf16.mxu0 0
    %1194 = vmatpush1.bf16.msra.mxu0 0
    %1195 = vmatprep.subr.bf16.mxu0 0
    %1196 = vmatpush1.bf16.msra.mxu0 0
    %1197 = vmatprep.subr.bf16.mxu0 0
    %1198 = vmatpush1.bf16.msra.mxu0 0
    %1199 = vmatprep.mubr.bf16.mxu0 0
    %1200 = vmatmul.mubr.bf16.gmra.mrb[0].mxu0 %v1165
    %v1201 = vpop.f32.mrb[0].mxu0
    %v1202 = vadd.f32 0.0, %v1201
    %v1203 = vpop.f32.mrb[0].mxu0
    %v1204 = vpop.f32.mrb[0].mxu0
    %v1205 = vpop.f32.mrb[0].mxu0
    %1206 = vdwg.mxu0
    %v1207 = vadd.f32 %v1087, %v1202
    %v1208 = vxor.u32 %v1207, 2147483648
    %v1209 = vmul.f32 %v1208, 1.442695
    %v1210 = vpow.pop %v1209
    %v1211 = vadd.f32 %v1210, 1.0
    %v1212 = vrcp.pop %v1211
    %v1213 = vmul.f32 1.0, %v1212
    %v1214 = vtanh.pop %v1207
    %v1215 = vmul.f32 %v1213, %v1079
    %1217 = vrot.lane.b32.xlu0 %v1214, 64
    %v1218 = vpop.permute.xlu0 %1217
    %v1220 = vmul.f32 %v1213, %v1218
    %1222 = vrot.lane.b32.xlu0 %v1220, 32
    %v1223 = vpop.permute.xlu0 %1222
    %v1225 = vadd.f32 %v1215, %v1223
    %v1226 = vtanh.pop %v1225
    %1228 = vrot.lane.b32.xlu0 %v1226, 64
    %v1229 = vpop.permute.xlu0 %1228
    %v1231 = vmul.f32 %v1213, %v1229
    %v1232 = vld [vmem:[#allocation2 + $0x70] sm:$0xff]
    %v1233 = vld [vmem:[#allocation2 + $0x8] sm:$0xff]
    %v1234 = vpack.c.bf16 %v1159, %v1159
    %1236 = vrot.lane.b32.xlu0 %v1234, 32
    %v1237 = vpop.permute.xlu0 %1236
    %v1239 = vsel %vm206, %v1237, 0
    %1241 = vmatprep.subr.bf16.mxu0 0
    %1242 = vmatpush1.bf16.msra.mxu0 %v202
    %1243 = vmatprep.subr.bf16.mxu0 0
    %1244 = vmatpush1.bf16.msra.mxu0 %v203
    %1245 = vmatprep.subr.bf16.mxu0 0
    %1246 = vmatpush1.bf16.msra.mxu0 0
    %1247 = vmatprep.subr.bf16.mxu0 0
    %1248 = vmatpush1.bf16.msra.mxu0 0
    %1249 = vmatprep.subr.bf16.mxu0 0
    %1250 = vmatpush1.bf16.msra.mxu0 0
    %1251 = vmatprep.subr.bf16.mxu0 0
    %1252 = vmatpush1.bf16.msra.mxu0 0
    %1253 = vmatprep.subr.bf16.mxu0 0
    %1254 = vmatpush1.bf16.msra.mxu0 0
    %1255 = vmatprep.subr.bf16.mxu0 0
    %1256 = vmatpush1.bf16.msra.mxu0 0
    %1257 = vmatprep.subr.bf16.mxu0 0
    %1258 = vmatpush1.bf16.msra.mxu0 0
    %1259 = vmatprep.subr.bf16.mxu0 0
    %1260 = vmatpush1.bf16.msra.mxu0 0
    %1261 = vmatprep.subr.bf16.mxu0 0
    %1262 = vmatpush1.bf16.msra.mxu0 0
    %1263 = vmatprep.subr.bf16.mxu0 0
    %1264 = vmatpush1.bf16.msra.mxu0 0
    %1265 = vmatprep.subr.bf16.mxu0 0
    %1266 = vmatpush1.bf16.msra.mxu0 0
    %1267 = vmatprep.subr.bf16.mxu0 0
    %1268 = vmatpush1.bf16.msra.mxu0 0
    %1269 = vmatprep.subr.bf16.mxu0 0
    %1270 = vmatpush1.bf16.msra.mxu0 0
    %1271 = vmatprep.subr.bf16.mxu0 0
    %1272 = vmatpush1.bf16.msra.mxu0 0
    %1273 = vmatprep.mubr.bf16.mxu0 0
    %1274 = vmatmul.mubr.bf16.gmra.mrb[0].mxu0 %v1239
    %v1275 = vpop.f32.mrb[0].mxu0
    %v1276 = vadd.f32 0.0, %v1275
    %v1277 = vpop.f32.mrb[0].mxu0
    %v1278 = vpop.f32.mrb[0].mxu0
    %v1279 = vpop.f32.mrb[0].mxu0
    %1280 = vdwg.mxu0
    %v1281 = vadd.f32 %v1232, %v1276
    %v1282 = vxor.u32 %v1281, 2147483648
    %v1283 = vmul.f32 %v1282, 1.442695
    %v1284 = vpow.pop %v1283
    %v1285 = vadd.f32 %v1284, 1.0
    %v1286 = vrcp.pop %v1285
    %v1287 = vmul.f32 1.0, %v1286
    %v1288 = vtanh.pop %v1281
    %v1289 = vmul.f32 %v1287, %v1153
    %1291 = vrot.lane.b32.xlu0 %v1288, 64
    %v1292 = vpop.permute.xlu0 %1291
    %v1294 = vmul.f32 %v1287, %v1292
    %1296 = vrot.lane.b32.xlu0 %v1294, 32
    %v1297 = vpop.permute.xlu0 %1296
    %v1299 = vadd.f32 %v1289, %v1297
    %v1300 = vtanh.pop %v1299
    %1302 = vrot.lane.b32.xlu0 %v1300, 64
    %v1303 = vpop.permute.xlu0 %1302
    %v1305 = vmul.f32 %v1287, %v1303
    %v1306 = vpack.c.bf16 %v1231, %v1231
    %1308 = vrot.lane.b32.xlu0 %v1306, 32
    %v1309 = vpop.permute.xlu0 %1308
    %v1311 = vsel %vm206, %v1309, 0
    %1313 = vmatprep.subr.bf16.mxu0 0
    %1314 = vmatpush1.bf16.msra.mxu0 %v287
    %1315 = vmatprep.subr.bf16.mxu0 0
    %1316 = vmatpush1.bf16.msra.mxu0 %v288
    %1317 = vmatprep.subr.bf16.mxu0 0
    %1318 = vmatpush1.bf16.msra.mxu0 0
    %1319 = vmatprep.subr.bf16.mxu0 0
    %1320 = vmatpush1.bf16.msra.mxu0 0
    %1321 = vmatprep.subr.bf16.mxu0 0
    %1322 = vmatpush1.bf16.msra.mxu0 0
    %1323 = vmatprep.subr.bf16.mxu0 0
    %1324 = vmatpush1.bf16.msra.mxu0 0
    %1325 = vmatprep.subr.bf16.mxu0 0
    %1326 = vmatpush1.bf16.msra.mxu0 0
    %1327 = vmatprep.subr.bf16.mxu0 0
    %1328 = vmatpush1.bf16.msra.mxu0 0
    %1329 = vmatprep.subr.bf16.mxu0 0
    %1330 = vmatpush1.bf16.msra.mxu0 0
    %1331 = vmatprep.subr.bf16.mxu0 0
    %1332 = vmatpush1.bf16.msra.mxu0 0
    %1333 = vmatprep.subr.bf16.mxu0 0
    %1334 = vmatpush1.bf16.msra.mxu0 0
    %1335 = vmatprep.subr.bf16.mxu0 0
    %1336 = vmatpush1.bf16.msra.mxu0 0
    %1337 = vmatprep.subr.bf16.mxu0 0
    %1338 = vmatpush1.bf16.msra.mxu0 0
    %1339 = vmatprep.subr.bf16.mxu0 0
    %1340 = vmatpush1.bf16.msra.mxu0 0
    %1341 = vmatprep.subr.bf16.mxu0 0
    %1342 = vmatpush1.bf16.msra.mxu0 0
    %1343 = vmatprep.subr.bf16.mxu0 0
    %1344 = vmatpush1.bf16.msra.mxu0 0
    %1345 = vmatprep.mubr.bf16.mxu0 0
    %1346 = vmatmul.mubr.bf16.gmra.mrb[0].mxu0 %v1311
    %v1347 = vpop.f32.mrb[0].mxu0
    %v1348 = vadd.f32 0.0, %v1347
    %v1349 = vpop.f32.mrb[0].mxu0
    %v1350 = vpop.f32.mrb[0].mxu0
    %v1351 = vpop.f32.mrb[0].mxu0
    %1352 = vdwg.mxu0
    %v1353 = vadd.f32 %v1233, %v1348
    %v1354 = vxor.u32 %v1353, 2147483648
    %v1355 = vmul.f32 %v1354, 1.442695
    %v1356 = vpow.pop %v1355
    %v1357 = vadd.f32 %v1356, 1.0
    %v1358 = vrcp.pop %v1357
    %v1359 = vmul.f32 1.0, %v1358
    %v1360 = vtanh.pop %v1353
    %v1361 = vmul.f32 %v1359, %v1225
    %1363 = vrot.lane.b32.xlu0 %v1360, 64
    %v1364 = vpop.permute.xlu0 %1363
    %v1366 = vmul.f32 %v1359, %v1364
    %1368 = vrot.lane.b32.xlu0 %v1366, 32
    %v1369 = vpop.permute.xlu0 %1368
    %v1371 = vadd.f32 %v1361, %v1369
    %v1372 = vtanh.pop %v1371
    %1374 = vrot.lane.b32.xlu0 %v1372, 64
    %v1375 = vpop.permute.xlu0 %1374
    %v1377 = vmul.f32 %v1359, %v1375
    %v1378 = vlaneseq
    %v1379 = vand.u32 %v1378, 127
    %v1380 = vmul.f32 %v274, %v1305
    %v1381 = vmul.f32 %v1377, %v1377
    %v1382 = vadd.f32 %v1380, %v1381
    %1384 = vrot.lane.b32.xlu0 %v1382, 32
    %v1385 = vpop.permute.xlu0 %1384
    %v1387 = vsel %vm206, %v1385, 0.0
    %1388 = vadd.xlane.f32.xlu0 %v1387
    %v1389 = vpop.xlane.xlu0 %1388
    %vm1390 = vcmp.eq.s32.totalorder %v1379, 0
    %v1391 = vsel %vm1390, 1, 0
    %vm1392 = vcmp.eq.s32.totalorder %v1391, 1
    %v1393 = vsel %vm1392, %v1389, 0.0
    %v1394 = vadd.f32 %v1393, 0.0
    %v1395 = vmul.f32 %v429, %v1305
    %v1396 = vmul.f32 %v1231, %v1377
    %v1397 = vadd.f32 %v1395, %v1396
    %1399 = vrot.lane.b32.xlu0 %v1397, 32
    %v1400 = vpop.permute.xlu0 %1399
    %v1402 = vsel %vm206, %v1400, 0.0
    %1403 = vadd.xlane.f32.xlu0 %v1402
    %v1404 = vpop.xlane.xlu0 %1403
    %vm1405 = vcmp.eq.s32.totalorder %v1379, 1
    %v1406 = vsel %vm1405, 1, 0
    %vm1407 = vcmp.eq.s32.totalorder %v1406, 1
    %v1408 = vsel %vm1407, %v1404, 0.0
    %v1409 = vadd.f32 %v1394, %v1408
    %v1410 = vmul.f32 %v575, %v1305
    %v1411 = vmul.f32 %v1085, %v1377
    %v1412 = vadd.f32 %v1410, %v1411
    %1414 = vrot.lane.b32.xlu0 %v1412, 32
    %v1415 = vpop.permute.xlu0 %1414
    %v1417 = vsel %vm206, %v1415, 0.0
    %1418 = vadd.xlane.f32.xlu0 %v1417
    %v1419 = vpop.xlane.xlu0 %1418
    %vm1420 = vcmp.eq.s32.totalorder %v1379, 2
    %v1421 = vsel %vm1420, 1, 0
    %vm1422 = vcmp.eq.s32.totalorder %v1421, 1
    %v1423 = vsel %vm1422, %v1419, 0.0
    %v1424 = vadd.f32 %v1409, %v1423
    %v1425 = vmul.f32 %v721, %v1305
    %v1426 = vmul.f32 %v939, %v1377
    %v1427 = vadd.f32 %v1425, %v1426
    %1429 = vrot.lane.b32.xlu0 %v1427, 32
    %v1430 = vpop.permute.xlu0 %1429
    %v1432 = vsel %vm206, %v1430, 0.0
    %1433 = vadd.xlane.f32.xlu0 %v1432
    %v1434 = vpop.xlane.xlu0 %1433
    %vm1435 = vcmp.eq.s32.totalorder %v1379, 3
    %v1436 = vsel %vm1435, 1, 0
    %vm1437 = vcmp.eq.s32.totalorder %v1436, 1
    %v1438 = vsel %vm1437, %v1434, 0.0
    %v1439 = vadd.f32 %v1424, %v1438
    %v1440 = vmul.f32 %v867, %v1305
    %v1441 = vmul.f32 %v793, %v1377
    %v1442 = vadd.f32 %v1440, %v1441
    %1444 = vrot.lane.b32.xlu0 %v1442, 32
    %v1445 = vpop.permute.xlu0 %1444
    %v1447 = vsel %vm206, %v1445, 0.0
    %1448 = vadd.xlane.f32.xlu0 %v1447
    %v1449 = vpop.xlane.xlu0 %1448
    %vm1450 = vcmp.eq.s32.totalorder %v1379, 4
    %v1451 = vsel %vm1450, 1, 0
    %vm1452 = vcmp.eq.s32.totalorder %v1451, 1
    %v1453 = vsel %vm1452, %v1449, 0.0
    %v1454 = vadd.f32 %v1439, %v1453
    %v1455 = vmul.f32 %v1013, %v1305
    %v1456 = vmul.f32 %v647, %v1377
    %v1457 = vadd.f32 %v1455, %v1456
    %1459 = vrot.lane.b32.xlu0 %v1457, 32
    %v1460 = vpop.permute.xlu0 %1459
    %v1462 = vsel %vm206, %v1460, 0.0
    %1463 = vadd.xlane.f32.xlu0 %v1462
    %v1464 = vpop.xlane.xlu0 %1463
    %vm1465 = vcmp.eq.s32.totalorder %v1379, 5
    %v1466 = vsel %vm1465, 1, 0
    %vm1467 = vcmp.eq.s32.totalorder %v1466, 1
    %v1468 = vsel %vm1467, %v1464, 0.0
    %v1469 = vadd.f32 %v1454, %v1468
    %v1470 = vmul.f32 %v1159, %v1305
    %v1471 = vmul.f32 %v501, %v1377
    %v1472 = vadd.f32 %v1470, %v1471
    %1474 = vrot.lane.b32.xlu0 %v1472, 32
    %v1475 = vpop.permute.xlu0 %1474
    %v1477 = vsel %vm206, %v1475, 0.0
    %1478 = vadd.xlane.f32.xlu0 %v1477
    %v1479 = vpop.xlane.xlu0 %1478
    %vm1480 = vcmp.eq.s32.totalorder %v1379, 6
    %v1481 = vsel %vm1480, 1, 0
    %vm1482 = vcmp.eq.s32.totalorder %v1481, 1
    %v1483 = vsel %vm1482, %v1479, 0.0
    %v1484 = vadd.f32 %v1469, %v1483
    %v1485 = vmul.f32 %v1305, %v1305
    %v1486 = vmul.f32 %v355, %v1377
    %v1487 = vadd.f32 %v1485, %v1486
    %1489 = vrot.lane.b32.xlu0 %v1487, 32
    %v1490 = vpop.permute.xlu0 %1489
    %v1492 = vsel %vm206, %v1490, 0.0
    %1493 = vadd.xlane.f32.xlu0 %v1492
    %v1494 = vpop.xlane.xlu0 %1493
    %vm1495 = vcmp.eq.s32.totalorder %v1379, 7
    %v1496 = vsel %vm1495, 1, 0
    %vm1497 = vcmp.eq.s32.totalorder %v1496, 1
    %v1498 = vsel %vm1497, %v1494, 0.0
    %v1499 = vadd.f32 %v1484, %v1498
    %vm1500 = vcmask 64512
    %v1501 = vsel %vm1500, %v1499, -inf
    %1502 = vmax.xlane.f32.xlu0 %v1501
    %v1503 = vpop.xlane.xlu0 %1502
    %v1504 = vsub.f32 %v1499, %v1503
    %v1505 = vmul.f32 %v1504, 1.442695
    %v1506 = vpow.pop %v1505
    %v1507 = vsel %vm1500, %v1506, 0.0
    %1508 = vadd.xlane.f32.xlu0 %v1507
    %v1509 = vpop.xlane.xlu0 %1508
    %v1510 = vrcp.pop %v1509
    %v1511 = vmul.f32 %v1506, %v1510
    %1513 = vset.pattern.permute.xlu0 0
    %1514 = vperm.xlu0 %1513, %v1511
    %v1515 = vpop.permute.xlu0 %1514
    %v1517 = vmul.f32 %v274, %v1515
    %v1518 = vadd.f32 %v1517, 0.0
    %v1519 = vmul.f32 %v1377, %v1515
    %v1520 = vadd.f32 %v1519, 0.0
    %1521 = vset.pattern.permute.xlu0 1
    %1522 = vperm.xlu0 %1521, %v1511
    %v1523 = vpop.permute.xlu0 %1522
    %v1525 = vmul.f32 %v429, %v1523
    %v1526 = vadd.f32 %v1518, %v1525
    %v1527 = vmul.f32 %v1231, %v1523
    %v1528 = vadd.f32 %v1520, %v1527
    %1529 = vset.pattern.permute.xlu0 2
    %1530 = vperm.xlu0 %1529, %v1511
    %v1531 = vpop.permute.xlu0 %1530
    %v1533 = vmul.f32 %v575, %v1531
    %v1534 = vadd.f32 %v1526, %v1533
    %v1535 = vmul.f32 %v1085, %v1531
    %v1536 = vadd.f32 %v1528, %v1535
    %1537 = vset.pattern.permute.xlu0 3
    %1538 = vperm.xlu0 %1537, %v1511
    %v1539 = vpop.permute.xlu0 %1538
    %v1541 = vmul.f32 %v721, %v1539
    %v1542 = vadd.f32 %v1534, %v1541
    %v1543 = vmul.f32 %v939, %v1539
    %v1544 = vadd.f32 %v1536, %v1543
    %1545 = vset.pattern.permute.xlu0 4
    %1546 = vperm.xlu0 %1545, %v1511
    %v1547 = vpop.permute.xlu0 %1546
    %v1549 = vmul.f32 %v867, %v1547
    %v1550 = vadd.f32 %v1542, %v1549
    %v1551 = vmul.f32 %v793, %v1547
    %v1552 = vadd.f32 %v1544, %v1551
    %1553 = vset.pattern.permute.xlu0 5
    %1554 = vperm.xlu0 %1553, %v1511
    %v1555 = vpop.permute.xlu0 %1554
    %v1557 = vmul.f32 %v1013, %v1555
    %v1558 = vadd.f32 %v1550, %v1557
    %v1559 = vmul.f32 %v647, %v1555
    %v1560 = vadd.f32 %v1552, %v1559
    %1561 = vset.pattern.permute.xlu0 6
    %1562 = vperm.xlu0 %1561, %v1511
    %v1563 = vpop.permute.xlu0 %1562
    %v1565 = vmul.f32 %v1159, %v1563
    %v1566 = vadd.f32 %v1558, %v1565
    %v1567 = vmul.f32 %v501, %v1563
    %v1568 = vadd.f32 %v1560, %v1567
    %1569 = vset.pattern.permute.xlu0 7
    %1570 = vperm.xlu0 %1569, %v1511
    %v1571 = vpop.permute.xlu0 %1570
    %v1573 = vmul.f32 %v1305, %v1571
    %v1574 = vadd.f32 %v1566, %v1573
    %v1575 = vmul.f32 %v355, %v1571
    %v1576 = vadd.f32 %v1568, %v1575
    %v1577 = vpack.c.bf16 %v1574, %v1574
    %v1578 = vld [vmem:[%s5] sm:$0xf]
    %v1579 = vld [vmem:[%s5 + $0x4] sm:$0xf]
    %v1580 = vld [vmem:[%s5 + $0x8] sm:$0xf]
    %v1581 = vld [vmem:[%s5 + $0xc] sm:$0xf]
    %v1582 = vpack.c.bf16 %v1576, %v1576
    %v1583 = vld [vmem:[%s6] sm:$0xf]
    %v1584 = vld [vmem:[%s6 + $0x4] sm:$0xf]
    %v1585 = vld [vmem:[%s6 + $0x8] sm:$0xf]
    %v1586 = vld [vmem:[%s6 + $0xc] sm:$0xf]
    %1588 = vrot.lane.b32.xlu0 %v1582, 32
    %v1589 = vpop.permute.xlu0 %1588
    %v1594 = vunpack.c.l.b16 %v1583
    %v1595 = vunpack.c.l.b16 %v1584
    %v1596 = vunpack.c.l.b16 %v1585
    %v1597 = vunpack.c.l.b16 %v1586
    %v1598 = vpack.c.b16 %v1595, %v1594
    %v1599 = vpack.c.b16 %v1597, %v1596
    %v1603 = vsel %vm206, %v1589, 0
    %1605 = vmatprep.subr.bf16.mxu0 0
    %1606 = vmatpush1.bf16.msra.mxu0 %v1598
    %1607 = vmatprep.subr.bf16.mxu0 0
    %1608 = vmatpush1.bf16.msra.mxu0 %v1599
    %1609 = vmatprep.subr.bf16.mxu0 0
    %1610 = vmatpush1.bf16.msra.mxu0 0
    %1611 = vmatprep.subr.bf16.mxu0 0
    %1612 = vmatpush1.bf16.msra.mxu0 0
    %1613 = vmatprep.subr.bf16.mxu0 0
    %1614 = vmatpush1.bf16.msra.mxu0 0
    %1615 = vmatprep.subr.bf16.mxu0 0
    %1616 = vmatpush1.bf16.msra.mxu0 0
    %1617 = vmatprep.subr.bf16.mxu0 0
    %1618 = vmatpush1.bf16.msra.mxu0 0
    %1619 = vmatprep.subr.bf16.mxu0 0
    %1620 = vmatpush1.bf16.msra.mxu0 0
    %1621 = vmatprep.subr.bf16.mxu0 0
    %1622 = vmatpush1.bf16.msra.mxu0 0
    %1623 = vmatprep.subr.bf16.mxu0 0
    %1624 = vmatpush1.bf16.msra.mxu0 0
    %1625 = vmatprep.subr.bf16.mxu0 0
    %1626 = vmatpush1.bf16.msra.mxu0 0
    %1627 = vmatprep.subr.bf16.mxu0 0
    %1628 = vmatpush1.bf16.msra.mxu0 0
    %1629 = vmatprep.subr.bf16.mxu0 0
    %1630 = vmatpush1.bf16.msra.mxu0 0
    %1631 = vmatprep.subr.bf16.mxu0 0
    %1632 = vmatpush1.bf16.msra.mxu0 0
    %1633 = vmatprep.subr.bf16.mxu0 0
    %1634 = vmatpush1.bf16.msra.mxu0 0
    %1635 = vmatprep.subr.bf16.mxu0 0
    %1636 = vmatpush1.bf16.msra.mxu0 0
    %1637 = vmatprep.mubr.bf16.mxu0 0
    %1638 = vmatmul.mubr.bf16.gmra.mrb[0].mxu0 %v1603
    %v1639 = vpop.f32.mrb[0].mxu0
    %v1640 = vadd.f32 0.0, %v1639
    %v1641 = vpop.f32.mrb[0].mxu0
    %v1642 = vpop.f32.mrb[0].mxu0
    %v1643 = vpop.f32.mrb[0].mxu0
    %1644 = vdwg.mxu0
    %1646 = vrot.lane.b32.xlu0 %v1577, 32
    %v1647 = vpop.permute.xlu0 %1646
    %v1652 = vunpack.c.l.b16 %v1578
    %v1653 = vunpack.c.l.b16 %v1579
    %v1654 = vunpack.c.l.b16 %v1580
    %v1655 = vunpack.c.l.b16 %v1581
    %v1656 = vpack.c.b16 %v1653, %v1652
    %v1657 = vpack.c.b16 %v1655, %v1654
    %v1661 = vsel %vm206, %v1647, 0
    %1663 = vmatprep.subr.bf16.mxu0 0
    %1664 = vmatpush1.bf16.msra.mxu0 %v1656
    %1665 = vmatprep.subr.bf16.mxu0 0
    %1666 = vmatpush1.bf16.msra.mxu0 %v1657
    %1667 = vmatprep.subr.bf16.mxu0 0
    %1668 = vmatpush1.bf16.msra.mxu0 0
    %1669 = vmatprep.subr.bf16.mxu0 0
    %1670 = vmatpush1.bf16.msra.mxu0 0
    %1671 = vmatprep.subr.bf16.mxu0 0
    %1672 = vmatpush1.bf16.msra.mxu0 0
    %1673 = vmatprep.subr.bf16.mxu0 0
    %1674 = vmatpush1.bf16.msra.mxu0 0
    %1675 = vmatprep.subr.bf16.mxu0 0
    %1676 = vmatpush1.bf16.msra.mxu0 0
    %1677 = vmatprep.subr.bf16.mxu0 0
    %1678 = vmatpush1.bf16.msra.mxu0 0
    %1679 = vmatprep.subr.bf16.mxu0 0
    %1680 = vmatpush1.bf16.msra.mxu0 0
    %1681 = vmatprep.subr.bf16.mxu0 0
    %1682 = vmatpush1.bf16.msra.mxu0 0
    %1683 = vmatprep.subr.bf16.mxu0 0
    %1684 = vmatpush1.bf16.msra.mxu0 0
    %1685 = vmatprep.subr.bf16.mxu0 0
    %1686 = vmatpush1.bf16.msra.mxu0 0
    %1687 = vmatprep.subr.bf16.mxu0 0
    %1688 = vmatpush1.bf16.msra.mxu0 0
    %1689 = vmatprep.subr.bf16.mxu0 0
    %1690 = vmatpush1.bf16.msra.mxu0 0
    %1691 = vmatprep.subr.bf16.mxu0 0
    %1692 = vmatpush1.bf16.msra.mxu0 0
    %1693 = vmatprep.subr.bf16.mxu0 0
    %1694 = vmatpush1.bf16.msra.mxu0 0
    %1695 = vmatprep.mubr.bf16.mxu0 0
    %1696 = vmatmul.mubr.bf16.gmra.mrb[0].mxu0 %v1661
    %v1697 = vpop.f32.mrb[0].mxu0
    %v1698 = vadd.f32 %v1640, %v1697
    %v1699 = vpop.f32.mrb[0].mxu0
    %v1700 = vpop.f32.mrb[0].mxu0
    %v1701 = vpop.f32.mrb[0].mxu0
    %1702 = vdwg.mxu0
    %v1703 = vld [vmem:[%s7] sm:$0x1]
    %v1705 = vlaneseq
    %v1706 = vshrl.u32 %v1705, 7
    %v1707 = vsub.s32 0, %v1706
    %v1708 = vrot.slane %v1703, %v1707
    %v1710 = vadd.f32 %v1698, %v1708
    %vm1711 = vcmask 25600
    %1712 = vst.msk [vmem:[#allocation3] sm:$0x3] %vm1711, %v1710
    %vm1713 = vcmask 58368
    %1714 = vst.msk [vmem:[#allocation5] sm:$0x3] %vm1713, %v1511
    // Predicated region
    $region34: #{bilstm_attention_forward.1} parent=1 // pred_check
      _
    $region35: #{bilstm_attention_forward.1} parent=1 // pred_check_branch
      %1716 = sbr.rel (0) target = $region37
    $region36: #{bilstm_attention_forward.1} parent=1 // pred_region
      %s1718 = ssub.s32 32, 32
      %1719 = vsyncadd [#allocation4], %s1718
      %s1721 = sshll.u32 [#allocation3], 4
      %s1722 = int_to_ptr.vmem [resolvable:$true] %s1721
      %1724 = dma.vmem_to_hbm [thread:$0]  %s1722, 32, %s8, [#allocation4]
    $region37: #{bilstm_attention_forward.1} parent=1 // pred_fallthru
      _
    // Predicated region
    $region38: #{bilstm_attention_forward.1} parent=1 // pred_check
      _
    $region39: #{bilstm_attention_forward.1} parent=1 // pred_check_branch
      %1726 = sbr.rel (0) target = $region41
    $region40: #{bilstm_attention_forward.1} parent=1 // pred_region
      %s1728 = ssub.s32 32, 32
      %1729 = vsyncadd [#allocation6], %s1728
      %s1731 = sshll.u32 [#allocation5], 4
      %s1732 = int_to_ptr.vmem [resolvable:$true] %s1731
      %1734 = dma.vmem_to_hbm [thread:$0]  %s1732, 32, %s9, [#allocation6]
    $region41: #{bilstm_attention_forward.1} parent=1 // pred_fallthru
      _
    // Predicated region
    $region42: #{bilstm_attention_forward.1} parent=1 // pred_check
      _
    $region43: #{bilstm_attention_forward.1} parent=1 // pred_check_branch
      %1736 = sbr.rel (0) target = $region45
    $region44: #{bilstm_attention_forward.1} parent=1 // pred_region
      %1737 = dma.done [#allocation4], 32
    $region45: #{bilstm_attention_forward.1} parent=1 // pred_fallthru
      _
    // Predicated region
    $region46: #{bilstm_attention_forward.1} parent=1 // pred_check
      _
    $region47: #{bilstm_attention_forward.1} parent=1 // pred_check_branch
      %1739 = sbr.rel (0) target = $region49
    $region48: #{bilstm_attention_forward.1} parent=1 // pred_region
      %1740 = dma.done [#allocation6], 32
    $region49: #{bilstm_attention_forward.1} parent=1 // pred_fallthru
      _
    %1741 = vsyncpa [#allocation4], 1
    %1742 = vsyncpa [#allocation6], 1

</llo_original>
